<compile_context>
chip_gen: v6e
topology: v6e:2x2x1
jax: 0.10.0
libtpu: 0.0.40
codegen_flags: <defaults>
</compile_context>

<pallas_src>
import functools

import jax
import jax.numpy as jnp
from jax.experimental import pallas as pl
from jax.experimental.pallas import tpu as pltpu


# ----------------------------- Pallas kernel ------------------------------- #

def _make_lstm_kernel(num_layers: int, seq_len: int, hidden_dim: int,
                      batch_p: int, offsets: dict):
    """Build a kernel closed over the static loop structure + slab offsets."""
    H, T, Bp = hidden_dim, seq_len, batch_p

    def kernel(x_ref, w_ref, b_ref, out_ref):
        # x_ref : (T*Bp, D_in)       bf16
        # w_ref : (rows, 4H)         bf16  -- packed weight slab
        # b_ref : (num_layers+2, 4H) f32   -- packed bias slab
        # out_ref: (Bp, 4H)          f32   -- lane-dense padded output

        def wblk(name):
            off, rows = offsets[name]
            return w_ref[pl.ds(off, rows), :]          # static, tile-aligned

        layer_in = x_ref[...]                          # bf16 (T*Bp, D_in)
        h = None
        for l in range(num_layers):
            wih_t = wblk(f"wih{l}")                    # bf16 (D_in_l, 4H) [i,f,o,g]
            whh_t = wblk(f"whh{l}")                    # bf16 (H, 4H)      [i,f,o,g]
            bias = b_ref[pl.ds(l, 1), :]               # f32  (1, 4H)

            # Hoisted input projection: one matmul for all timesteps of this layer.
            zx = (jnp.dot(layer_in, wih_t, preferred_element_type=jnp.float32)
                  + bias)                              # f32 (T*Bp, 4H)

            h = jnp.zeros((Bp, H), jnp.float32)
            c = jnp.zeros((Bp, H), jnp.float32)
            last_layer = (l == num_layers - 1)
            outs = []
            for t in range(T):                         # static unroll (small T)
                # Only the recurrent matmul sits on the serial critical path.
                z = zx[t * Bp:(t + 1) * Bp, :] + jnp.dot(
                    h.astype(jnp.bfloat16), whh_t,
                    preferred_element_type=jnp.float32)        # f32 (Bp, 4H)
                sg = jax.nn.sigmoid(z[:, :3 * H])              # one sigmoid: i|f|o
                g_g = jnp.tanh(z[:, 3 * H:])                   # one tanh:    g
                i_g = sg[:, 0 * H:1 * H]
                f_g = sg[:, 1 * H:2 * H]
                o_g = sg[:, 2 * H:3 * H]
                c = f_g * c + i_g * g_g
                h = o_g * jnp.tanh(c)
                if not last_layer:
                    outs.append(h.astype(jnp.bfloat16))
            if not last_layer:
                # Next layer's input stays in vregs -- no VMEM scratch round trip.
                layer_in = jnp.concatenate(outs, axis=0)       # bf16 (T*Bp, H)

        # Regressor on lstm_out[-1] (== final h of the top layer).
        # TODO(synk): Dropout is identity here (eval-mode); BatchNorm1d omitted
        #             because the module is built with use_bn=False.
        rw1 = wblk("rw1")                              # bf16 (H, 4H)  cols padded
        rw2 = wblk("rw2")                              # bf16 (4H, 4H) rows/cols padded
        rb1 = b_ref[pl.ds(num_layers + 0, 1), :]       # f32 (1, 4H)   padded
        rb2 = b_ref[pl.ds(num_layers + 1, 1), :]       # f32 (1, 4H)   padded
        hid = jnp.maximum(
            jnp.dot(h.astype(jnp.bfloat16), rw1,
                    preferred_element_type=jnp.float32) + rb1, 0.0)   # (Bp, 4H)
        y = (jnp.dot(hid.astype(jnp.bfloat16), rw2,
                     preferred_element_type=jnp.float32) + rb2)       # (Bp, 4H)
        out_ref[...] = y.astype(out_ref.dtype)         # single unmasked vreg store

    return kernel


# ------------------------------ JAX wrapper -------------------------------- #

def _reorder_gates(w, hidden_dim):
    """Permute PyTorch gate blocks [i, f, g, o] -> [i, f, o, g] along axis 0."""
    H = hidden_dim
    return jnp.concatenate([w[:2 * H], w[3 * H:4 * H], w[2 * H:3 * H]], axis=0)


def lstm_forward(x, params, *, num_layers, hidden_dim, output_dim):
    """x: (seq_len, batch, input_dim) f32.  params: dict of PyTorch-shaped weights."""
    seq_len, batch, input_dim = x.shape
    H = hidden_dim
    W = 4 * H                                   # common lane width of all slabs
    SUB = 16                                    # bf16 sublane tile
    assert W % 128 == 0 and output_dim <= W and H // 2 <= W
    Bp = max(8, -(-batch // 8) * 8)             # pad batch to full 8-sublane vreg

    # --- input: pad batch rows, flatten time*batch, cast MXU operand to bf16 ---
    x_p = jnp.zeros((seq_len, Bp, input_dim), x.dtype).at[:, :batch].set(x)
    x_flat = x_p.reshape(seq_len * Bp, input_dim).astype(jnp.bfloat16)

    # --- pack ALL weights into one bf16 slab, ALL biases into one f32 slab ---
    blocks, offsets, bias_rows = [], {}, []
    row = 0

    def add(name, w):                           # w: (rows, cols<=W) f32
        nonlocal row
        r, c = w.shape
        rp = -r % SUB                           # keep blocks on bf16 tile rows
        blocks.append(jnp.pad(w, ((0, rp), (0, W - c))).astype(jnp.bfloat16))
        offsets[name] = (row, r)
        row += r + rp

    for l in range(num_layers):
        w_ih = _reorder_gates(params[f"weight_ih_l{l}"], H)       # (4H, D_in_l)
        w_hh = _reorder_gates(params[f"weight_hh_l{l}"], H)       # (4H, H)
        add(f"wih{l}", w_ih.T)                                    # (D_in_l, 4H)
        add(f"whh{l}", w_hh.T)                                    # (H, 4H)
        bias_rows.append(_reorder_gates(
            params[f"bias_ih_l{l}"] + params[f"bias_hh_l{l}"], H))  # (4H,)
    add("rw1", params["reg_w1"].T)                                # (H, H//2) -> pad cols
    rw2_pad = jnp.zeros((W, output_dim), jnp.float32).at[:H // 2].set(
        params["reg_w2"].T)                                       # consumes padded hid
    add("rw2", rw2_pad)                                           # (4H, out) -> pad cols
    bias_rows.append(jnp.pad(params["reg_b1"], (0, W - H // 2)))
    bias_rows.append(jnp.pad(params["reg_b2"], (0, W - output_dim)))

    w_slab = jnp.concatenate(blocks, axis=0)                      # (rows, 4H) bf16
    b_slab = jnp.stack(bias_rows, axis=0).astype(jnp.float32)     # (L+2, 4H)  f32

    kernel = _make_lstm_kernel(num_layers, seq_len, H, Bp, offsets)
    vmem = pl.BlockSpec(memory_space=pltpu.MemorySpace.VMEM)

    y_pad = pl.pallas_call(
        kernel,
        out_shape=jax.ShapeDtypeStruct((Bp, W), jnp.float32),
        in_specs=[vmem, vmem, vmem],            # 3 HBM->VMEM DMAs total
        out_specs=vmem,
    )(x_flat, w_slab, b_slab)
    return y_pad[:batch, :output_dim]


# ------------------------- Pure-JAX reference (check) ----------------------- #

def lstm_reference(x, params, *, num_layers, hidden_dim):
    seq_len, batch, _ = x.shape
    H = hidden_dim
    layer_in = x
    h = jnp.zeros((batch, H), jnp.float32)
    for l in range(num_layers):
        w_ih = params[f"weight_ih_l{l}"]
        w_hh = params[f"weight_hh_l{l}"]
        b = params[f"bias_ih_l{l}"] + params[f"bias_hh_l{l}"]
        h = jnp.zeros((batch, H), jnp.float32)
        c = jnp.zeros((batch, H), jnp.float32)
        outs = []
        for t in range(seq_len):
            z = layer_in[t] @ w_ih.T + h @ w_hh.T + b
            i_g = jax.nn.sigmoid(z[:, 0 * H:1 * H])
            f_g = jax.nn.sigmoid(z[:, 1 * H:2 * H])
            g_g = jnp.tanh(z[:, 2 * H:3 * H])
            o_g = jax.nn.sigmoid(z[:, 3 * H:4 * H])
            c = f_g * c + i_g * g_g
            h = o_g * jnp.tanh(c)
            outs.append(h)
        layer_in = jnp.stack(outs, axis=0)
    hid = jnp.maximum(h @ params["reg_w1"].T + params["reg_b1"], 0.0)
    return hid @ params["reg_w2"].T + params["reg_b2"]


# ---------------------------------- main ------------------------------------ #

if __name__ == "__main__":
    # Module hyper-params (small, consistent with the PyTorch __init__).
    input_dim, hidden_dim, output_dim = 16, 32, 4
    num_layers, batch_size, seq_len = 2, 2, 8
    # dropout=0.2 (identity in eval), use_bn=False

    key = jax.random.PRNGKey(0)
    keys = iter(jax.random.split(key, 32))
    k_init = 1.0 / jnp.sqrt(hidden_dim)

    def uni(shape):
        return jax.random.uniform(next(keys), shape, jnp.float32, -k_init, k_init)

    params = {}
    for l in range(num_layers):
        d_in = input_dim if l == 0 else hidden_dim
        params[f"weight_ih_l{l}"] = uni((4 * hidden_dim, d_in))
        params[f"weight_hh_l{l}"] = uni((4 * hidden_dim, hidden_dim))
        params[f"bias_ih_l{l}"] = uni((4 * hidden_dim,))
        params[f"bias_hh_l{l}"] = uni((4 * hidden_dim,))
    params["reg_w1"] = uni((hidden_dim // 2, hidden_dim))
    params["reg_b1"] = uni((hidden_dim // 2,))
    params["reg_w2"] = uni((output_dim, hidden_dim // 2))
    params["reg_b2"] = uni((output_dim,))

    x = jax.random.normal(next(keys), (seq_len, batch_size, input_dim), jnp.float32)

    fwd = jax.jit(functools.partial(
        lstm_forward, num_layers=num_layers,
        hidden_dim=hidden_dim, output_dim=output_dim))
    y = fwd(x, params)
    jax.block_until_ready(y)

    y_ref = lstm_reference(x, params, num_layers=num_layers, hidden_dim=hidden_dim)
    assert y.shape == (batch_size, output_dim)
    # Tolerance widened vs a pure-f32 version: matmul operands are bf16
    # (f32 accumulation), so inputs carry ~2^-9 relative rounding.
    assert jnp.allclose(y, y_ref, atol=2e-2, rtol=2e-2), "mismatch vs reference"

    print("KERNEL_OK")
</pallas_src>

<mosaic_0001>
module attributes {stable_mosaic.version = 11 : i64} {
  func.func @kernel(%arg0: memref<64x16xbf16, #tpu.memory_space<vmem>>, %arg1: memref<272x128xbf16, #tpu.memory_space<vmem>>, %arg2: memref<4x128xf32, #tpu.memory_space<vmem>>, %arg3: memref<8x128xf32, #tpu.memory_space<vmem>>) attributes {dimension_semantics = [], scalar_prefetch = 0 : i64, scratch_operands = 0 : i64, tpu.core_type = #tpu.core_type<tc>} {
    %c0 = arith.constant 0 : index
    %c0_0 = arith.constant 0 : index
    %0 = vector.load %arg0[%c0, %c0_0] : memref<64x16xbf16, #tpu.memory_space<vmem>>, vector<64x16xbf16>
    %c0_1 = arith.constant 0 : index
    %c0_2 = arith.constant 0 : index
    %1 = vector.load %arg1[%c0_1, %c0_2] : memref<272x128xbf16, #tpu.memory_space<vmem>>, vector<16x128xbf16>
    %c16 = arith.constant 16 : index
    %c0_3 = arith.constant 0 : index
    %2 = vector.load %arg1[%c16, %c0_3] : memref<272x128xbf16, #tpu.memory_space<vmem>>, vector<32x128xbf16>
    %c0_4 = arith.constant 0 : index
    %c0_5 = arith.constant 0 : index
    %3 = vector.load %arg2[%c0_4, %c0_5] : memref<4x128xf32, #tpu.memory_space<vmem>>, vector<1x128xf32>
    %cst = arith.constant dense<0.000000e+00> : vector<64x128xf32>
    %4 = tpu.matmul %0, %1, %cst {dimension_numbers = #tpu.dot_dimension_numbers<[1], [0], [0], [1], [0, 0, 1, 1], [], []>} : vector<64x16xbf16>, vector<16x128xbf16>, vector<64x128xf32> -> vector<64x128xf32>
    %5 = vector.broadcast %3 : vector<1x128xf32> to vector<64x128xf32>
    %6 = arith.addf %4, %5 : vector<64x128xf32>
    %cst_6 = arith.constant 0.000000e+00 : f32
    %7 = vector.broadcast %cst_6 : f32 to vector<8x32xf32>
    %cst_7 = arith.constant 0.000000e+00 : f32
    %8 = vector.broadcast %cst_7 : f32 to vector<8x32xf32>
    %9 = vector.extract_strided_slice %6 {offsets = [0, 0], sizes = [8, 128], strides = [1, 1]} : vector<64x128xf32> to vector<8x128xf32>
    %10 = arith.truncf %7 : vector<8x32xf32> to vector<8x32xbf16>
    %cst_8 = arith.constant dense<0.000000e+00> : vector<8x128xf32>
    %11 = tpu.matmul %10, %2, %cst_8 {dimension_numbers = #tpu.dot_dimension_numbers<[1], [0], [0], [1], [0, 0, 1, 1], [], []>} : vector<8x32xbf16>, vector<32x128xbf16>, vector<8x128xf32> -> vector<8x128xf32>
    %12 = arith.addf %9, %11 : vector<8x128xf32>
    %13 = vector.extract_strided_slice %12 {offsets = [0, 0], sizes = [8, 96], strides = [1, 1]} : vector<8x128xf32> to vector<8x96xf32>
    %14 = arith.negf %13 : vector<8x96xf32>
    %15 = math.exp %14 : vector<8x96xf32>
    %cst_9 = arith.constant 1.000000e+00 : f32
    %16 = vector.broadcast %cst_9 : f32 to vector<8x96xf32>
    %17 = arith.addf %16, %15 : vector<8x96xf32>
    %18 = arith.divf %16, %17 : vector<8x96xf32>
    %19 = vector.extract_strided_slice %12 {offsets = [0, 96], sizes = [8, 32], strides = [1, 1]} : vector<8x128xf32> to vector<8x32xf32>
    %20 = math.tanh %19 : vector<8x32xf32>
    %21 = vector.extract_strided_slice %18 {offsets = [0, 0], sizes = [8, 32], strides = [1, 1]} : vector<8x96xf32> to vector<8x32xf32>
    %22 = vector.extract_strided_slice %18 {offsets = [0, 32], sizes = [8, 32], strides = [1, 1]} : vector<8x96xf32> to vector<8x32xf32>
    %23 = vector.extract_strided_slice %18 {offsets = [0, 64], sizes = [8, 32], strides = [1, 1]} : vector<8x96xf32> to vector<8x32xf32>
    %24 = arith.mulf %22, %8 : vector<8x32xf32>
    %25 = arith.mulf %21, %20 : vector<8x32xf32>
    %26 = arith.addf %24, %25 : vector<8x32xf32>
    %27 = math.tanh %26 : vector<8x32xf32>
    %28 = arith.mulf %23, %27 : vector<8x32xf32>
    %29 = arith.truncf %28 : vector<8x32xf32> to vector<8x32xbf16>
    %30 = vector.extract_strided_slice %6 {offsets = [8, 0], sizes = [8, 128], strides = [1, 1]} : vector<64x128xf32> to vector<8x128xf32>
    %31 = arith.truncf %28 : vector<8x32xf32> to vector<8x32xbf16>
    %cst_10 = arith.constant dense<0.000000e+00> : vector<8x128xf32>
    %32 = tpu.matmul %31, %2, %cst_10 {dimension_numbers = #tpu.dot_dimension_numbers<[1], [0], [0], [1], [0, 0, 1, 1], [], []>} : vector<8x32xbf16>, vector<32x128xbf16>, vector<8x128xf32> -> vector<8x128xf32>
    %33 = arith.addf %30, %32 : vector<8x128xf32>
    %34 = vector.extract_strided_slice %33 {offsets = [0, 0], sizes = [8, 96], strides = [1, 1]} : vector<8x128xf32> to vector<8x96xf32>
    %35 = arith.negf %34 : vector<8x96xf32>
    %36 = math.exp %35 : vector<8x96xf32>
    %cst_11 = arith.constant 1.000000e+00 : f32
    %37 = vector.broadcast %cst_11 : f32 to vector<8x96xf32>
    %38 = arith.addf %37, %36 : vector<8x96xf32>
    %39 = arith.divf %37, %38 : vector<8x96xf32>
    %40 = vector.extract_strided_slice %33 {offsets = [0, 96], sizes = [8, 32], strides = [1, 1]} : vector<8x128xf32> to vector<8x32xf32>
    %41 = math.tanh %40 : vector<8x32xf32>
    %42 = vector.extract_strided_slice %39 {offsets = [0, 0], sizes = [8, 32], strides = [1, 1]} : vector<8x96xf32> to vector<8x32xf32>
    %43 = vector.extract_strided_slice %39 {offsets = [0, 32], sizes = [8, 32], strides = [1, 1]} : vector<8x96xf32> to vector<8x32xf32>
    %44 = vector.extract_strided_slice %39 {offsets = [0, 64], sizes = [8, 32], strides = [1, 1]} : vector<8x96xf32> to vector<8x32xf32>
    %45 = arith.mulf %43, %26 : vector<8x32xf32>
    %46 = arith.mulf %42, %41 : vector<8x32xf32>
    %47 = arith.addf %45, %46 : vector<8x32xf32>
    %48 = math.tanh %47 : vector<8x32xf32>
    %49 = arith.mulf %44, %48 : vector<8x32xf32>
    %50 = arith.truncf %49 : vector<8x32xf32> to vector<8x32xbf16>
    %51 = vector.extract_strided_slice %6 {offsets = [16, 0], sizes = [8, 128], strides = [1, 1]} : vector<64x128xf32> to vector<8x128xf32>
    %52 = arith.truncf %49 : vector<8x32xf32> to vector<8x32xbf16>
    %cst_12 = arith.constant dense<0.000000e+00> : vector<8x128xf32>
    %53 = tpu.matmul %52, %2, %cst_12 {dimension_numbers = #tpu.dot_dimension_numbers<[1], [0], [0], [1], [0, 0, 1, 1], [], []>} : vector<8x32xbf16>, vector<32x128xbf16>, vector<8x128xf32> -> vector<8x128xf32>
    %54 = arith.addf %51, %53 : vector<8x128xf32>
    %55 = vector.extract_strided_slice %54 {offsets = [0, 0], sizes = [8, 96], strides = [1, 1]} : vector<8x128xf32> to vector<8x96xf32>
    %56 = arith.negf %55 : vector<8x96xf32>
    %57 = math.exp %56 : vector<8x96xf32>
    %cst_13 = arith.constant 1.000000e+00 : f32
    %58 = vector.broadcast %cst_13 : f32 to vector<8x96xf32>
    %59 = arith.addf %58, %57 : vector<8x96xf32>
    %60 = arith.divf %58, %59 : vector<8x96xf32>
    %61 = vector.extract_strided_slice %54 {offsets = [0, 96], sizes = [8, 32], strides = [1, 1]} : vector<8x128xf32> to vector<8x32xf32>
    %62 = math.tanh %61 : vector<8x32xf32>
    %63 = vector.extract_strided_slice %60 {offsets = [0, 0], sizes = [8, 32], strides = [1, 1]} : vector<8x96xf32> to vector<8x32xf32>
    %64 = vector.extract_strided_slice %60 {offsets = [0, 32], sizes = [8, 32], strides = [1, 1]} : vector<8x96xf32> to vector<8x32xf32>
    %65 = vector.extract_strided_slice %60 {offsets = [0, 64], sizes = [8, 32], strides = [1, 1]} : vector<8x96xf32> to vector<8x32xf32>
    %66 = arith.mulf %64, %47 : vector<8x32xf32>
    %67 = arith.mulf %63, %62 : vector<8x32xf32>
    %68 = arith.addf %66, %67 : vector<8x32xf32>
    %69 = math.tanh %68 : vector<8x32xf32>
    %70 = arith.mulf %65, %69 : vector<8x32xf32>
    %71 = arith.truncf %70 : vector<8x32xf32> to vector<8x32xbf16>
    %72 = vector.extract_strided_slice %6 {offsets = [24, 0], sizes = [8, 128], strides = [1, 1]} : vector<64x128xf32> to vector<8x128xf32>
    %73 = arith.truncf %70 : vector<8x32xf32> to vector<8x32xbf16>
    %cst_14 = arith.constant dense<0.000000e+00> : vector<8x128xf32>
    %74 = tpu.matmul %73, %2, %cst_14 {dimension_numbers = #tpu.dot_dimension_numbers<[1], [0], [0], [1], [0, 0, 1, 1], [], []>} : vector<8x32xbf16>, vector<32x128xbf16>, vector<8x128xf32> -> vector<8x128xf32>
    %75 = arith.addf %72, %74 : vector<8x128xf32>
    %76 = vector.extract_strided_slice %75 {offsets = [0, 0], sizes = [8, 96], strides = [1, 1]} : vector<8x128xf32> to vector<8x96xf32>
    %77 = arith.negf %76 : vector<8x96xf32>
    %78 = math.exp %77 : vector<8x96xf32>
    %cst_15 = arith.constant 1.000000e+00 : f32
    %79 = vector.broadcast %cst_15 : f32 to vector<8x96xf32>
    %80 = arith.addf %79, %78 : vector<8x96xf32>
    %81 = arith.divf %79, %80 : vector<8x96xf32>
    %82 = vector.extract_strided_slice %75 {offsets = [0, 96], sizes = [8, 32], strides = [1, 1]} : vector<8x128xf32> to vector<8x32xf32>
    %83 = math.tanh %82 : vector<8x32xf32>
    %84 = vector.extract_strided_slice %81 {offsets = [0, 0], sizes = [8, 32], strides = [1, 1]} : vector<8x96xf32> to vector<8x32xf32>
    %85 = vector.extract_strided_slice %81 {offsets = [0, 32], sizes = [8, 32], strides = [1, 1]} : vector<8x96xf32> to vector<8x32xf32>
    %86 = vector.extract_strided_slice %81 {offsets = [0, 64], sizes = [8, 32], strides = [1, 1]} : vector<8x96xf32> to vector<8x32xf32>
    %87 = arith.mulf %85, %68 : vector<8x32xf32>
    %88 = arith.mulf %84, %83 : vector<8x32xf32>
    %89 = arith.addf %87, %88 : vector<8x32xf32>
    %90 = math.tanh %89 : vector<8x32xf32>
    %91 = arith.mulf %86, %90 : vector<8x32xf32>
    %92 = arith.truncf %91 : vector<8x32xf32> to vector<8x32xbf16>
    %93 = vector.extract_strided_slice %6 {offsets = [32, 0], sizes = [8, 128], strides = [1, 1]} : vector<64x128xf32> to vector<8x128xf32>
    %94 = arith.truncf %91 : vector<8x32xf32> to vector<8x32xbf16>
    %cst_16 = arith.constant dense<0.000000e+00> : vector<8x128xf32>
    %95 = tpu.matmul %94, %2, %cst_16 {dimension_numbers = #tpu.dot_dimension_numbers<[1], [0], [0], [1], [0, 0, 1, 1], [], []>} : vector<8x32xbf16>, vector<32x128xbf16>, vector<8x128xf32> -> vector<8x128xf32>
    %96 = arith.addf %93, %95 : vector<8x128xf32>
    %97 = vector.extract_strided_slice %96 {offsets = [0, 0], sizes = [8, 96], strides = [1, 1]} : vector<8x128xf32> to vector<8x96xf32>
    %98 = arith.negf %97 : vector<8x96xf32>
    %99 = math.exp %98 : vector<8x96xf32>
    %cst_17 = arith.constant 1.000000e+00 : f32
    %100 = vector.broadcast %cst_17 : f32 to vector<8x96xf32>
    %101 = arith.addf %100, %99 : vector<8x96xf32>
    %102 = arith.divf %100, %101 : vector<8x96xf32>
    %103 = vector.extract_strided_slice %96 {offsets = [0, 96], sizes = [8, 32], strides = [1, 1]} : vector<8x128xf32> to vector<8x32xf32>
    %104 = math.tanh %103 : vector<8x32xf32>
    %105 = vector.extract_strided_slice %102 {offsets = [0, 0], sizes = [8, 32], strides = [1, 1]} : vector<8x96xf32> to vector<8x32xf32>
    %106 = vector.extract_strided_slice %102 {offsets = [0, 32], sizes = [8, 32], strides = [1, 1]} : vector<8x96xf32> to vector<8x32xf32>
    %107 = vector.extract_strided_slice %102 {offsets = [0, 64], sizes = [8, 32], strides = [1, 1]} : vector<8x96xf32> to vector<8x32xf32>
    %108 = arith.mulf %106, %89 : vector<8x32xf32>
    %109 = arith.mulf %105, %104 : vector<8x32xf32>
    %110 = arith.addf %108, %109 : vector<8x32xf32>
    %111 = math.tanh %110 : vector<8x32xf32>
    %112 = arith.mulf %107, %111 : vector<8x32xf32>
    %113 = arith.truncf %112 : vector<8x32xf32> to vector<8x32xbf16>
    %114 = vector.extract_strided_slice %6 {offsets = [40, 0], sizes = [8, 128], strides = [1, 1]} : vector<64x128xf32> to vector<8x128xf32>
    %115 = arith.truncf %112 : vector<8x32xf32> to vector<8x32xbf16>
    %cst_18 = arith.constant dense<0.000000e+00> : vector<8x128xf32>
    %116 = tpu.matmul %115, %2, %cst_18 {dimension_numbers = #tpu.dot_dimension_numbers<[1], [0], [0], [1], [0, 0, 1, 1], [], []>} : vector<8x32xbf16>, vector<32x128xbf16>, vector<8x128xf32> -> vector<8x128xf32>
    %117 = arith.addf %114, %116 : vector<8x128xf32>
    %118 = vector.extract_strided_slice %117 {offsets = [0, 0], sizes = [8, 96], strides = [1, 1]} : vector<8x128xf32> to vector<8x96xf32>
    %119 = arith.negf %118 : vector<8x96xf32>
    %120 = math.exp %119 : vector<8x96xf32>
    %cst_19 = arith.constant 1.000000e+00 : f32
    %121 = vector.broadcast %cst_19 : f32 to vector<8x96xf32>
    %122 = arith.addf %121, %120 : vector<8x96xf32>
    %123 = arith.divf %121, %122 : vector<8x96xf32>
    %124 = vector.extract_strided_slice %117 {offsets = [0, 96], sizes = [8, 32], strides = [1, 1]} : vector<8x128xf32> to vector<8x32xf32>
    %125 = math.tanh %124 : vector<8x32xf32>
    %126 = vector.extract_strided_slice %123 {offsets = [0, 0], sizes = [8, 32], strides = [1, 1]} : vector<8x96xf32> to vector<8x32xf32>
    %127 = vector.extract_strided_slice %123 {offsets = [0, 32], sizes = [8, 32], strides = [1, 1]} : vector<8x96xf32> to vector<8x32xf32>
    %128 = vector.extract_strided_slice %123 {offsets = [0, 64], sizes = [8, 32], strides = [1, 1]} : vector<8x96xf32> to vector<8x32xf32>
    %129 = arith.mulf %127, %110 : vector<8x32xf32>
    %130 = arith.mulf %126, %125 : vector<8x32xf32>
    %131 = arith.addf %129, %130 : vector<8x32xf32>
    %132 = math.tanh %131 : vector<8x32xf32>
    %133 = arith.mulf %128, %132 : vector<8x32xf32>
    %134 = arith.truncf %133 : vector<8x32xf32> to vector<8x32xbf16>
    %135 = vector.extract_strided_slice %6 {offsets = [48, 0], sizes = [8, 128], strides = [1, 1]} : vector<64x128xf32> to vector<8x128xf32>
    %136 = arith.truncf %133 : vector<8x32xf32> to vector<8x32xbf16>
    %cst_20 = arith.constant dense<0.000000e+00> : vector<8x128xf32>
    %137 = tpu.matmul %136, %2, %cst_20 {dimension_numbers = #tpu.dot_dimension_numbers<[1], [0], [0], [1], [0, 0, 1, 1], [], []>} : vector<8x32xbf16>, vector<32x128xbf16>, vector<8x128xf32> -> vector<8x128xf32>
    %138 = arith.addf %135, %137 : vector<8x128xf32>
    %139 = vector.extract_strided_slice %138 {offsets = [0, 0], sizes = [8, 96], strides = [1, 1]} : vector<8x128xf32> to vector<8x96xf32>
    %140 = arith.negf %139 : vector<8x96xf32>
    %141 = math.exp %140 : vector<8x96xf32>
    %cst_21 = arith.constant 1.000000e+00 : f32
    %142 = vector.broadcast %cst_21 : f32 to vector<8x96xf32>
    %143 = arith.addf %142, %141 : vector<8x96xf32>
    %144 = arith.divf %142, %143 : vector<8x96xf32>
    %145 = vector.extract_strided_slice %138 {offsets = [0, 96], sizes = [8, 32], strides = [1, 1]} : vector<8x128xf32> to vector<8x32xf32>
    %146 = math.tanh %145 : vector<8x32xf32>
    %147 = vector.extract_strided_slice %144 {offsets = [0, 0], sizes = [8, 32], strides = [1, 1]} : vector<8x96xf32> to vector<8x32xf32>
    %148 = vector.extract_strided_slice %144 {offsets = [0, 32], sizes = [8, 32], strides = [1, 1]} : vector<8x96xf32> to vector<8x32xf32>
    %149 = vector.extract_strided_slice %144 {offsets = [0, 64], sizes = [8, 32], strides = [1, 1]} : vector<8x96xf32> to vector<8x32xf32>
    %150 = arith.mulf %148, %131 : vector<8x32xf32>
    %151 = arith.mulf %147, %146 : vector<8x32xf32>
    %152 = arith.addf %150, %151 : vector<8x32xf32>
    %153 = math.tanh %152 : vector<8x32xf32>
    %154 = arith.mulf %149, %153 : vector<8x32xf32>
    %155 = arith.truncf %154 : vector<8x32xf32> to vector<8x32xbf16>
    %156 = vector.extract_strided_slice %6 {offsets = [56, 0], sizes = [8, 128], strides = [1, 1]} : vector<64x128xf32> to vector<8x128xf32>
    %157 = arith.truncf %154 : vector<8x32xf32> to vector<8x32xbf16>
    %cst_22 = arith.constant dense<0.000000e+00> : vector<8x128xf32>
    %158 = tpu.matmul %157, %2, %cst_22 {dimension_numbers = #tpu.dot_dimension_numbers<[1], [0], [0], [1], [0, 0, 1, 1], [], []>} : vector<8x32xbf16>, vector<32x128xbf16>, vector<8x128xf32> -> vector<8x128xf32>
    %159 = arith.addf %156, %158 : vector<8x128xf32>
    %160 = vector.extract_strided_slice %159 {offsets = [0, 0], sizes = [8, 96], strides = [1, 1]} : vector<8x128xf32> to vector<8x96xf32>
    %161 = arith.negf %160 : vector<8x96xf32>
    %162 = math.exp %161 : vector<8x96xf32>
    %cst_23 = arith.constant 1.000000e+00 : f32
    %163 = vector.broadcast %cst_23 : f32 to vector<8x96xf32>
    %164 = arith.addf %163, %162 : vector<8x96xf32>
    %165 = arith.divf %163, %164 : vector<8x96xf32>
    %166 = vector.extract_strided_slice %159 {offsets = [0, 96], sizes = [8, 32], strides = [1, 1]} : vector<8x128xf32> to vector<8x32xf32>
    %167 = math.tanh %166 : vector<8x32xf32>
    %168 = vector.extract_strided_slice %165 {offsets = [0, 0], sizes = [8, 32], strides = [1, 1]} : vector<8x96xf32> to vector<8x32xf32>
    %169 = vector.extract_strided_slice %165 {offsets = [0, 32], sizes = [8, 32], strides = [1, 1]} : vector<8x96xf32> to vector<8x32xf32>
    %170 = vector.extract_strided_slice %165 {offsets = [0, 64], sizes = [8, 32], strides = [1, 1]} : vector<8x96xf32> to vector<8x32xf32>
    %171 = arith.mulf %169, %152 : vector<8x32xf32>
    %172 = arith.mulf %168, %167 : vector<8x32xf32>
    %173 = arith.addf %171, %172 : vector<8x32xf32>
    %174 = math.tanh %173 : vector<8x32xf32>
    %175 = arith.mulf %170, %174 : vector<8x32xf32>
    %176 = arith.truncf %175 : vector<8x32xf32> to vector<8x32xbf16>
    %177 = tpu.concatenate %29, %50, %71, %92, %113, %134, %155, %176 in 0 : vector<8x32xbf16>, vector<8x32xbf16>, vector<8x32xbf16>, vector<8x32xbf16>, vector<8x32xbf16>, vector<8x32xbf16>, vector<8x32xbf16>, vector<8x32xbf16> -> vector<64x32xbf16>
    %c48 = arith.constant 48 : index
    %c0_24 = arith.constant 0 : index
    %178 = vector.load %arg1[%c48, %c0_24] : memref<272x128xbf16, #tpu.memory_space<vmem>>, vector<32x128xbf16>
    %c80 = arith.constant 80 : index
    %c0_25 = arith.constant 0 : index
    %179 = vector.load %arg1[%c80, %c0_25] : memref<272x128xbf16, #tpu.memory_space<vmem>>, vector<32x128xbf16>
    %c1 = arith.constant 1 : index
    %c0_26 = arith.constant 0 : index
    %180 = vector.load %arg2[%c1, %c0_26] : memref<4x128xf32, #tpu.memory_space<vmem>>, vector<1x128xf32>
    %cst_27 = arith.constant dense<0.000000e+00> : vector<64x128xf32>
    %181 = tpu.matmul %177, %178, %cst_27 {dimension_numbers = #tpu.dot_dimension_numbers<[1], [0], [0], [1], [0, 0, 1, 1], [], []>} : vector<64x32xbf16>, vector<32x128xbf16>, vector<64x128xf32> -> vector<64x128xf32>
    %182 = vector.broadcast %180 : vector<1x128xf32> to vector<64x128xf32>
    %183 = arith.addf %181, %182 : vector<64x128xf32>
    %cst_28 = arith.constant 0.000000e+00 : f32
    %184 = vector.broadcast %cst_28 : f32 to vector<8x32xf32>
    %cst_29 = arith.constant 0.000000e+00 : f32
    %185 = vector.broadcast %cst_29 : f32 to vector<8x32xf32>
    %186 = vector.extract_strided_slice %183 {offsets = [0, 0], sizes = [8, 128], strides = [1, 1]} : vector<64x128xf32> to vector<8x128xf32>
    %187 = arith.truncf %184 : vector<8x32xf32> to vector<8x32xbf16>
    %cst_30 = arith.constant dense<0.000000e+00> : vector<8x128xf32>
    %188 = tpu.matmul %187, %179, %cst_30 {dimension_numbers = #tpu.dot_dimension_numbers<[1], [0], [0], [1], [0, 0, 1, 1], [], []>} : vector<8x32xbf16>, vector<32x128xbf16>, vector<8x128xf32> -> vector<8x128xf32>
    %189 = arith.addf %186, %188 : vector<8x128xf32>
    %190 = vector.extract_strided_slice %189 {offsets = [0, 0], sizes = [8, 96], strides = [1, 1]} : vector<8x128xf32> to vector<8x96xf32>
    %191 = arith.negf %190 : vector<8x96xf32>
    %192 = math.exp %191 : vector<8x96xf32>
    %cst_31 = arith.constant 1.000000e+00 : f32
    %193 = vector.broadcast %cst_31 : f32 to vector<8x96xf32>
    %194 = arith.addf %193, %192 : vector<8x96xf32>
    %195 = arith.divf %193, %194 : vector<8x96xf32>
    %196 = vector.extract_strided_slice %189 {offsets = [0, 96], sizes = [8, 32], strides = [1, 1]} : vector<8x128xf32> to vector<8x32xf32>
    %197 = math.tanh %196 : vector<8x32xf32>
    %198 = vector.extract_strided_slice %195 {offsets = [0, 0], sizes = [8, 32], strides = [1, 1]} : vector<8x96xf32> to vector<8x32xf32>
    %199 = vector.extract_strided_slice %195 {offsets = [0, 32], sizes = [8, 32], strides = [1, 1]} : vector<8x96xf32> to vector<8x32xf32>
    %200 = vector.extract_strided_slice %195 {offsets = [0, 64], sizes = [8, 32], strides = [1, 1]} : vector<8x96xf32> to vector<8x32xf32>
    %201 = arith.mulf %199, %185 : vector<8x32xf32>
    %202 = arith.mulf %198, %197 : vector<8x32xf32>
    %203 = arith.addf %201, %202 : vector<8x32xf32>
    %204 = math.tanh %203 : vector<8x32xf32>
    %205 = arith.mulf %200, %204 : vector<8x32xf32>
    %206 = vector.extract_strided_slice %183 {offsets = [8, 0], sizes = [8, 128], strides = [1, 1]} : vector<64x128xf32> to vector<8x128xf32>
    %207 = arith.truncf %205 : vector<8x32xf32> to vector<8x32xbf16>
    %cst_32 = arith.constant dense<0.000000e+00> : vector<8x128xf32>
    %208 = tpu.matmul %207, %179, %cst_32 {dimension_numbers = #tpu.dot_dimension_numbers<[1], [0], [0], [1], [0, 0, 1, 1], [], []>} : vector<8x32xbf16>, vector<32x128xbf16>, vector<8x128xf32> -> vector<8x128xf32>
    %209 = arith.addf %206, %208 : vector<8x128xf32>
    %210 = vector.extract_strided_slice %209 {offsets = [0, 0], sizes = [8, 96], strides = [1, 1]} : vector<8x128xf32> to vector<8x96xf32>
    %211 = arith.negf %210 : vector<8x96xf32>
    %212 = math.exp %211 : vector<8x96xf32>
    %cst_33 = arith.constant 1.000000e+00 : f32
    %213 = vector.broadcast %cst_33 : f32 to vector<8x96xf32>
    %214 = arith.addf %213, %212 : vector<8x96xf32>
    %215 = arith.divf %213, %214 : vector<8x96xf32>
    %216 = vector.extract_strided_slice %209 {offsets = [0, 96], sizes = [8, 32], strides = [1, 1]} : vector<8x128xf32> to vector<8x32xf32>
    %217 = math.tanh %216 : vector<8x32xf32>
    %218 = vector.extract_strided_slice %215 {offsets = [0, 0], sizes = [8, 32], strides = [1, 1]} : vector<8x96xf32> to vector<8x32xf32>
    %219 = vector.extract_strided_slice %215 {offsets = [0, 32], sizes = [8, 32], strides = [1, 1]} : vector<8x96xf32> to vector<8x32xf32>
    %220 = vector.extract_strided_slice %215 {offsets = [0, 64], sizes = [8, 32], strides = [1, 1]} : vector<8x96xf32> to vector<8x32xf32>
    %221 = arith.mulf %219, %203 : vector<8x32xf32>
    %222 = arith.mulf %218, %217 : vector<8x32xf32>
    %223 = arith.addf %221, %222 : vector<8x32xf32>
    %224 = math.tanh %223 : vector<8x32xf32>
    %225 = arith.mulf %220, %224 : vector<8x32xf32>
    %226 = vector.extract_strided_slice %183 {offsets = [16, 0], sizes = [8, 128], strides = [1, 1]} : vector<64x128xf32> to vector<8x128xf32>
    %227 = arith.truncf %225 : vector<8x32xf32> to vector<8x32xbf16>
    %cst_34 = arith.constant dense<0.000000e+00> : vector<8x128xf32>
    %228 = tpu.matmul %227, %179, %cst_34 {dimension_numbers = #tpu.dot_dimension_numbers<[1], [0], [0], [1], [0, 0, 1, 1], [], []>} : vector<8x32xbf16>, vector<32x128xbf16>, vector<8x128xf32> -> vector<8x128xf32>
    %229 = arith.addf %226, %228 : vector<8x128xf32>
    %230 = vector.extract_strided_slice %229 {offsets = [0, 0], sizes = [8, 96], strides = [1, 1]} : vector<8x128xf32> to vector<8x96xf32>
    %231 = arith.negf %230 : vector<8x96xf32>
    %232 = math.exp %231 : vector<8x96xf32>
    %cst_35 = arith.constant 1.000000e+00 : f32
    %233 = vector.broadcast %cst_35 : f32 to vector<8x96xf32>
    %234 = arith.addf %233, %232 : vector<8x96xf32>
    %235 = arith.divf %233, %234 : vector<8x96xf32>
    %236 = vector.extract_strided_slice %229 {offsets = [0, 96], sizes = [8, 32], strides = [1, 1]} : vector<8x128xf32> to vector<8x32xf32>
    %237 = math.tanh %236 : vector<8x32xf32>
    %238 = vector.extract_strided_slice %235 {offsets = [0, 0], sizes = [8, 32], strides = [1, 1]} : vector<8x96xf32> to vector<8x32xf32>
    %239 = vector.extract_strided_slice %235 {offsets = [0, 32], sizes = [8, 32], strides = [1, 1]} : vector<8x96xf32> to vector<8x32xf32>
    %240 = vector.extract_strided_slice %235 {offsets = [0, 64], sizes = [8, 32], strides = [1, 1]} : vector<8x96xf32> to vector<8x32xf32>
    %241 = arith.mulf %239, %223 : vector<8x32xf32>
    %242 = arith.mulf %238, %237 : vector<8x32xf32>
    %243 = arith.addf %241, %242 : vector<8x32xf32>
    %244 = math.tanh %243 : vector<8x32xf32>
    %245 = arith.mulf %240, %244 : vector<8x32xf32>
    %246 = vector.extract_strided_slice %183 {offsets = [24, 0], sizes = [8, 128], strides = [1, 1]} : vector<64x128xf32> to vector<8x128xf32>
    %247 = arith.truncf %245 : vector<8x32xf32> to vector<8x32xbf16>
    %cst_36 = arith.constant dense<0.000000e+00> : vector<8x128xf32>
    %248 = tpu.matmul %247, %179, %cst_36 {dimension_numbers = #tpu.dot_dimension_numbers<[1], [0], [0], [1], [0, 0, 1, 1], [], []>} : vector<8x32xbf16>, vector<32x128xbf16>, vector<8x128xf32> -> vector<8x128xf32>
    %249 = arith.addf %246, %248 : vector<8x128xf32>
    %250 = vector.extract_strided_slice %249 {offsets = [0, 0], sizes = [8, 96], strides = [1, 1]} : vector<8x128xf32> to vector<8x96xf32>
    %251 = arith.negf %250 : vector<8x96xf32>
    %252 = math.exp %251 : vector<8x96xf32>
    %cst_37 = arith.constant 1.000000e+00 : f32
    %253 = vector.broadcast %cst_37 : f32 to vector<8x96xf32>
    %254 = arith.addf %253, %252 : vector<8x96xf32>
    %255 = arith.divf %253, %254 : vector<8x96xf32>
    %256 = vector.extract_strided_slice %249 {offsets = [0, 96], sizes = [8, 32], strides = [1, 1]} : vector<8x128xf32> to vector<8x32xf32>
    %257 = math.tanh %256 : vector<8x32xf32>
    %258 = vector.extract_strided_slice %255 {offsets = [0, 0], sizes = [8, 32], strides = [1, 1]} : vector<8x96xf32> to vector<8x32xf32>
    %259 = vector.extract_strided_slice %255 {offsets = [0, 32], sizes = [8, 32], strides = [1, 1]} : vector<8x96xf32> to vector<8x32xf32>
    %260 = vector.extract_strided_slice %255 {offsets = [0, 64], sizes = [8, 32], strides = [1, 1]} : vector<8x96xf32> to vector<8x32xf32>
    %261 = arith.mulf %259, %243 : vector<8x32xf32>
    %262 = arith.mulf %258, %257 : vector<8x32xf32>
    %263 = arith.addf %261, %262 : vector<8x32xf32>
    %264 = math.tanh %263 : vector<8x32xf32>
    %265 = arith.mulf %260, %264 : vector<8x32xf32>
    %266 = vector.extract_strided_slice %183 {offsets = [32, 0], sizes = [8, 128], strides = [1, 1]} : vector<64x128xf32> to vector<8x128xf32>
    %267 = arith.truncf %265 : vector<8x32xf32> to vector<8x32xbf16>
    %cst_38 = arith.constant dense<0.000000e+00> : vector<8x128xf32>
    %268 = tpu.matmul %267, %179, %cst_38 {dimension_numbers = #tpu.dot_dimension_numbers<[1], [0], [0], [1], [0, 0, 1, 1], [], []>} : vector<8x32xbf16>, vector<32x128xbf16>, vector<8x128xf32> -> vector<8x128xf32>
    %269 = arith.addf %266, %268 : vector<8x128xf32>
    %270 = vector.extract_strided_slice %269 {offsets = [0, 0], sizes = [8, 96], strides = [1, 1]} : vector<8x128xf32> to vector<8x96xf32>
    %271 = arith.negf %270 : vector<8x96xf32>
    %272 = math.exp %271 : vector<8x96xf32>
    %cst_39 = arith.constant 1.000000e+00 : f32
    %273 = vector.broadcast %cst_39 : f32 to vector<8x96xf32>
    %274 = arith.addf %273, %272 : vector<8x96xf32>
    %275 = arith.divf %273, %274 : vector<8x96xf32>
    %276 = vector.extract_strided_slice %269 {offsets = [0, 96], sizes = [8, 32], strides = [1, 1]} : vector<8x128xf32> to vector<8x32xf32>
    %277 = math.tanh %276 : vector<8x32xf32>
    %278 = vector.extract_strided_slice %275 {offsets = [0, 0], sizes = [8, 32], strides = [1, 1]} : vector<8x96xf32> to vector<8x32xf32>
    %279 = vector.extract_strided_slice %275 {offsets = [0, 32], sizes = [8, 32], strides = [1, 1]} : vector<8x96xf32> to vector<8x32xf32>
    %280 = vector.extract_strided_slice %275 {offsets = [0, 64], sizes = [8, 32], strides = [1, 1]} : vector<8x96xf32> to vector<8x32xf32>
    %281 = arith.mulf %279, %263 : vector<8x32xf32>
    %282 = arith.mulf %278, %277 : vector<8x32xf32>
    %283 = arith.addf %281, %282 : vector<8x32xf32>
    %284 = math.tanh %283 : vector<8x32xf32>
    %285 = arith.mulf %280, %284 : vector<8x32xf32>
    %286 = vector.extract_strided_slice %183 {offsets = [40, 0], sizes = [8, 128], strides = [1, 1]} : vector<64x128xf32> to vector<8x128xf32>
    %287 = arith.truncf %285 : vector<8x32xf32> to vector<8x32xbf16>
    %cst_40 = arith.constant dense<0.000000e+00> : vector<8x128xf32>
    %288 = tpu.matmul %287, %179, %cst_40 {dimension_numbers = #tpu.dot_dimension_numbers<[1], [0], [0], [1], [0, 0, 1, 1], [], []>} : vector<8x32xbf16>, vector<32x128xbf16>, vector<8x128xf32> -> vector<8x128xf32>
    %289 = arith.addf %286, %288 : vector<8x128xf32>
    %290 = vector.extract_strided_slice %289 {offsets = [0, 0], sizes = [8, 96], strides = [1, 1]} : vector<8x128xf32> to vector<8x96xf32>
    %291 = arith.negf %290 : vector<8x96xf32>
    %292 = math.exp %291 : vector<8x96xf32>
    %cst_41 = arith.constant 1.000000e+00 : f32
    %293 = vector.broadcast %cst_41 : f32 to vector<8x96xf32>
    %294 = arith.addf %293, %292 : vector<8x96xf32>
    %295 = arith.divf %293, %294 : vector<8x96xf32>
    %296 = vector.extract_strided_slice %289 {offsets = [0, 96], sizes = [8, 32], strides = [1, 1]} : vector<8x128xf32> to vector<8x32xf32>
    %297 = math.tanh %296 : vector<8x32xf32>
    %298 = vector.extract_strided_slice %295 {offsets = [0, 0], sizes = [8, 32], strides = [1, 1]} : vector<8x96xf32> to vector<8x32xf32>
    %299 = vector.extract_strided_slice %295 {offsets = [0, 32], sizes = [8, 32], strides = [1, 1]} : vector<8x96xf32> to vector<8x32xf32>
    %300 = vector.extract_strided_slice %295 {offsets = [0, 64], sizes = [8, 32], strides = [1, 1]} : vector<8x96xf32> to vector<8x32xf32>
    %301 = arith.mulf %299, %283 : vector<8x32xf32>
    %302 = arith.mulf %298, %297 : vector<8x32xf32>
    %303 = arith.addf %301, %302 : vector<8x32xf32>
    %304 = math.tanh %303 : vector<8x32xf32>
    %305 = arith.mulf %300, %304 : vector<8x32xf32>
    %306 = vector.extract_strided_slice %183 {offsets = [48, 0], sizes = [8, 128], strides = [1, 1]} : vector<64x128xf32> to vector<8x128xf32>
    %307 = arith.truncf %305 : vector<8x32xf32> to vector<8x32xbf16>
    %cst_42 = arith.constant dense<0.000000e+00> : vector<8x128xf32>
    %308 = tpu.matmul %307, %179, %cst_42 {dimension_numbers = #tpu.dot_dimension_numbers<[1], [0], [0], [1], [0, 0, 1, 1], [], []>} : vector<8x32xbf16>, vector<32x128xbf16>, vector<8x128xf32> -> vector<8x128xf32>
    %309 = arith.addf %306, %308 : vector<8x128xf32>
    %310 = vector.extract_strided_slice %309 {offsets = [0, 0], sizes = [8, 96], strides = [1, 1]} : vector<8x128xf32> to vector<8x96xf32>
    %311 = arith.negf %310 : vector<8x96xf32>
    %312 = math.exp %311 : vector<8x96xf32>
    %cst_43 = arith.constant 1.000000e+00 : f32
    %313 = vector.broadcast %cst_43 : f32 to vector<8x96xf32>
    %314 = arith.addf %313, %312 : vector<8x96xf32>
    %315 = arith.divf %313, %314 : vector<8x96xf32>
    %316 = vector.extract_strided_slice %309 {offsets = [0, 96], sizes = [8, 32], strides = [1, 1]} : vector<8x128xf32> to vector<8x32xf32>
    %317 = math.tanh %316 : vector<8x32xf32>
    %318 = vector.extract_strided_slice %315 {offsets = [0, 0], sizes = [8, 32], strides = [1, 1]} : vector<8x96xf32> to vector<8x32xf32>
    %319 = vector.extract_strided_slice %315 {offsets = [0, 32], sizes = [8, 32], strides = [1, 1]} : vector<8x96xf32> to vector<8x32xf32>
    %320 = vector.extract_strided_slice %315 {offsets = [0, 64], sizes = [8, 32], strides = [1, 1]} : vector<8x96xf32> to vector<8x32xf32>
    %321 = arith.mulf %319, %303 : vector<8x32xf32>
    %322 = arith.mulf %318, %317 : vector<8x32xf32>
    %323 = arith.addf %321, %322 : vector<8x32xf32>
    %324 = math.tanh %323 : vector<8x32xf32>
    %325 = arith.mulf %320, %324 : vector<8x32xf32>
    %326 = vector.extract_strided_slice %183 {offsets = [56, 0], sizes = [8, 128], strides = [1, 1]} : vector<64x128xf32> to vector<8x128xf32>
    %327 = arith.truncf %325 : vector<8x32xf32> to vector<8x32xbf16>
    %cst_44 = arith.constant dense<0.000000e+00> : vector<8x128xf32>
    %328 = tpu.matmul %327, %179, %cst_44 {dimension_numbers = #tpu.dot_dimension_numbers<[1], [0], [0], [1], [0, 0, 1, 1], [], []>} : vector<8x32xbf16>, vector<32x128xbf16>, vector<8x128xf32> -> vector<8x128xf32>
    %329 = arith.addf %326, %328 : vector<8x128xf32>
    %330 = vector.extract_strided_slice %329 {offsets = [0, 0], sizes = [8, 96], strides = [1, 1]} : vector<8x128xf32> to vector<8x96xf32>
    %331 = arith.negf %330 : vector<8x96xf32>
    %332 = math.exp %331 : vector<8x96xf32>
    %cst_45 = arith.constant 1.000000e+00 : f32
    %333 = vector.broadcast %cst_45 : f32 to vector<8x96xf32>
    %334 = arith.addf %333, %332 : vector<8x96xf32>
    %335 = arith.divf %333, %334 : vector<8x96xf32>
    %336 = vector.extract_strided_slice %329 {offsets = [0, 96], sizes = [8, 32], strides = [1, 1]} : vector<8x128xf32> to vector<8x32xf32>
    %337 = math.tanh %336 : vector<8x32xf32>
    %338 = vector.extract_strided_slice %335 {offsets = [0, 0], sizes = [8, 32], strides = [1, 1]} : vector<8x96xf32> to vector<8x32xf32>
    %339 = vector.extract_strided_slice %335 {offsets = [0, 32], sizes = [8, 32], strides = [1, 1]} : vector<8x96xf32> to vector<8x32xf32>
    %340 = vector.extract_strided_slice %335 {offsets = [0, 64], sizes = [8, 32], strides = [1, 1]} : vector<8x96xf32> to vector<8x32xf32>
    %341 = arith.mulf %339, %323 : vector<8x32xf32>
    %342 = arith.mulf %338, %337 : vector<8x32xf32>
    %343 = arith.addf %341, %342 : vector<8x32xf32>
    %344 = math.tanh %343 : vector<8x32xf32>
    %345 = arith.mulf %340, %344 : vector<8x32xf32>
    %c112 = arith.constant 112 : index
    %c0_46 = arith.constant 0 : index
    %346 = vector.load %arg1[%c112, %c0_46] : memref<272x128xbf16, #tpu.memory_space<vmem>>, vector<32x128xbf16>
    %c144 = arith.constant 144 : index
    %c0_47 = arith.constant 0 : index
    %347 = vector.load %arg1[%c144, %c0_47] : memref<272x128xbf16, #tpu.memory_space<vmem>>, vector<128x128xbf16>
    %c2 = arith.constant 2 : index
    %c0_48 = arith.constant 0 : index
    %348 = vector.load %arg2[%c2, %c0_48] : memref<4x128xf32, #tpu.memory_space<vmem>>, vector<1x128xf32>
    %c3 = arith.constant 3 : index
    %c0_49 = arith.constant 0 : index
    %349 = vector.load %arg2[%c3, %c0_49] : memref<4x128xf32, #tpu.memory_space<vmem>>, vector<1x128xf32>
    %350 = arith.truncf %345 : vector<8x32xf32> to vector<8x32xbf16>
    %cst_50 = arith.constant dense<0.000000e+00> : vector<8x128xf32>
    %351 = tpu.matmul %350, %346, %cst_50 {dimension_numbers = #tpu.dot_dimension_numbers<[1], [0], [0], [1], [0, 0, 1, 1], [], []>} : vector<8x32xbf16>, vector<32x128xbf16>, vector<8x128xf32> -> vector<8x128xf32>
    %352 = vector.broadcast %348 : vector<1x128xf32> to vector<8x128xf32>
    %353 = arith.addf %351, %352 : vector<8x128xf32>
    %cst_51 = arith.constant 0.000000e+00 : f32
    %354 = vector.broadcast %cst_51 : f32 to vector<8x128xf32>
    %355 = arith.maximumf %353, %354 : vector<8x128xf32>
    %356 = arith.truncf %355 : vector<8x128xf32> to vector<8x128xbf16>
    %cst_52 = arith.constant dense<0.000000e+00> : vector<8x128xf32>
    %357 = tpu.matmul %356, %347, %cst_52 {dimension_numbers = #tpu.dot_dimension_numbers<[1], [0], [0], [1], [0, 0, 1, 1], [], []>} : vector<8x128xbf16>, vector<128x128xbf16>, vector<8x128xf32> -> vector<8x128xf32>
    %358 = vector.broadcast %349 : vector<1x128xf32> to vector<8x128xf32>
    %359 = arith.addf %357, %358 : vector<8x128xf32>
    %c0_53 = arith.constant 0 : index
    %c0_54 = arith.constant 0 : index
    %360 = vector.load %arg3[%c0_53, %c0_54] : memref<8x128xf32, #tpu.memory_space<vmem>>, vector<8x128xf32>
    tpu.vector_store %arg3[%c0_53, %c0_54], %359 {strides = array<i32>} : memref<8x128xf32, #tpu.memory_space<vmem>>, vector<8x128xf32>,
    return
  }
}

</mosaic_0001>

<llo_original>
// kernel: lstm_forward.1
$region0: #{lstm_forward.1}
  #allocation0 [shape = 'u32[]', space=smem, size = 0x4, offset = 0x4, fixed_abs, tag = 'smem constant byte address 0x4 - core index']
  #allocation1 [shape = 'u32[144,128]{1,0:T(1,128)}', space=vmem, size = 0x12000, scoped, tag = 'internal scratch']
  %s0 = inlined_call_operand.vmem [shape: bf16[64,16], index: 0, kind: input, shape index: {}]
  %s1 = inlined_call_operand.vmem [shape: bf16[272,128], index: 1, kind: input, shape index: {}]
  %s2 = inlined_call_operand.vmem [shape: f32[4,128], index: 2, kind: input, shape index: {}]
  %s3 = inlined_call_operand.vmem [shape: f32[8,128], index: 3, kind: output, shape index: {}]
  %s4 = sld [smem:[#allocation0]]
  $region22: #{lstm_forward.1} parent=0
    _
  %s6 = ssub.s32 1, %s4
  %s7 = scalar_select 0, %s6, %s4
  // Predicated region
  $region2: #{lstm_forward.1} parent=0 // pred_check
    _
  $region3: #{lstm_forward.1} parent=0 // pred_check_branch
    %9 = sbr.rel (0) target = $region5
  $region4: #{lstm_forward.1} parent=0 // pred_region
    _
  $region5: #{lstm_forward.1} parent=0 // pred_fallthru
    _
  // Predicated region
  $region6: #{lstm_forward.1} parent=0 // pred_check
    _
  $region7: #{lstm_forward.1} parent=0 // pred_check_branch
    %11 = sbr.rel (0) target = $region9
  $region8: #{lstm_forward.1} parent=0 // pred_region
    _
  $region9: #{lstm_forward.1} parent=0 // pred_fallthru
    _
  // Predicated region
  $region10: #{lstm_forward.1} parent=0 // pred_check
    _
  $region11: #{lstm_forward.1} parent=0 // pred_check_branch
    %13 = sbr.rel (0) target = $region13
  $region12: #{lstm_forward.1} parent=0 // pred_region
    _
  $region13: #{lstm_forward.1} parent=0 // pred_fallthru
    _
  %v15 = vld [vmem:[%s0] sm:$0xf]
  %v16 = vld [vmem:[%s0 + $0x4] sm:$0xf]
  %v17 = vld [vmem:[%s0 + $0x8] sm:$0xf]
  %v18 = vld [vmem:[%s0 + $0xc] sm:$0xf]
  %v19 = vld [vmem:[%s0 + $0x10] sm:$0xf]
  %v20 = vld [vmem:[%s0 + $0x14] sm:$0xf]
  %v21 = vld [vmem:[%s0 + $0x18] sm:$0xf]
  %v22 = vld [vmem:[%s0 + $0x1c] sm:$0xf]
  %v23 = vld [vmem:[%s1] sm:$0xf]
  %v24 = vld [vmem:[%s1 + $0x4] sm:$0xf]
  %v25 = vld [vmem:[%s1 + $0x8] sm:$0xf]
  %v26 = vld [vmem:[%s1 + $0xc] sm:$0xf]
  %v27 = vld [vmem:[%s1 + $0x10] sm:$0xf]
  %v28 = vld [vmem:[%s1 + $0x14] sm:$0xf]
  %v29 = vld [vmem:[%s2] sm:$0x1]
  %v30 = vlaneseq
  %v31 = vshrl.u32 %v30, 7
  %v32 = vsub.s32 0, %v31
  %v33 = vrot.slane %v29, %v32
  %v42 = vunpack.c.l.b16 %v15
  %v43 = vunpack.c.l.b16 %v16
  %v44 = vunpack.c.l.b16 %v17
  %v45 = vunpack.c.l.b16 %v18
  %v46 = vunpack.c.l.b16 %v19
  %v47 = vunpack.c.l.b16 %v20
  %v48 = vunpack.c.l.b16 %v21
  %v49 = vunpack.c.l.b16 %v22
  %v50 = vpack.c.b16 %v43, %v42
  %v51 = vpack.c.b16 %v45, %v44
  %v52 = vpack.c.b16 %v47, %v46
  %v53 = vpack.c.b16 %v49, %v48
  %v56 = vunpack.c.l.b16 %v23
  %v57 = vunpack.c.l.b16 %v24
  %v58 = vpack.c.b16 %v57, %v56
  %vm60 = vcmask 130048
  %v62 = vsel %vm60, %v50, 0
  %v65 = vsel %vm60, %v51, 0
  %v68 = vsel %vm60, %v52, 0
  %v71 = vsel %vm60, %v53, 0
  %73 = vmatprep.subr.bf16.mxu0 0
  %74 = vmatpush1.bf16.msra.mxu0 0
  %75 = vmatprep.subr.bf16.mxu0 0
  %76 = vmatpush1.bf16.msra.mxu0 0
  %77 = vmatprep.subr.bf16.mxu0 0
  %78 = vmatpush1.bf16.msra.mxu0 0
  %79 = vmatprep.subr.bf16.mxu0 0
  %80 = vmatpush1.bf16.msra.mxu0 0
  %81 = vmatprep.subr.bf16.mxu0 0
  %82 = vmatpush1.bf16.msra.mxu0 0
  %83 = vmatprep.subr.bf16.mxu0 0
  %84 = vmatpush1.bf16.msra.mxu0 0
  %85 = vmatprep.subr.bf16.mxu0 0
  %86 = vmatpush1.bf16.msra.mxu0 0
  %87 = vmatprep.subr.bf16.mxu0 0
  %88 = vmatpush1.bf16.msra.mxu0 %v58
  %89 = vmatprep.subr.bf16.mxu0 0
  %90 = vmatpush2.bf16.msra.mxu0 0
  %91 = vmatprep.subr.bf16.mxu0 0
  %92 = vmatpush2.bf16.msra.mxu0 0
  %93 = vmatprep.subr.bf16.mxu0 0
  %94 = vmatpush2.bf16.msra.mxu0 0
  %95 = vmatprep.subr.bf16.mxu0 0
  %96 = vmatpush2.bf16.msra.mxu0 0
  %97 = vmatprep.subr.bf16.mxu0 0
  %98 = vmatpush2.bf16.msra.mxu0 0
  %99 = vmatprep.subr.bf16.mxu0 0
  %100 = vmatpush2.bf16.msra.mxu0 0
  %101 = vmatprep.subr.bf16.mxu0 0
  %102 = vmatpush2.bf16.msra.mxu0 0
  %103 = vmatprep.subr.bf16.mxu0 0
  %104 = vmatpush2.bf16.msra.mxu0 0
  %105 = vmatprep.mubr.bf16.mxu0 0
  %106 = vmatmul.mubr.bf16.gmra.mxu0 %v62
  %v107 = vpop.f32.mrf.mxu0
  %v108 = vadd.f32 %v33, %v107
  %v109 = vpop.f32.mrf.mxu0
  %v110 = vpop.f32.mrf.mxu0
  %v111 = vadd.f32 %v33, %v110
  %v112 = vpop.f32.mrf.mxu0
  %113 = vmatprep.mubr.bf16.mxu0 0
  %114 = vmatmul.mubr.bf16.gmra.mxu0 %v65
  %v115 = vpop.f32.mrf.mxu0
  %v116 = vadd.f32 %v33, %v115
  %v117 = vpop.f32.mrf.mxu0
  %v118 = vpop.f32.mrf.mxu0
  %v119 = vadd.f32 %v33, %v118
  %v120 = vpop.f32.mrf.mxu0
  %121 = vmatprep.mubr.bf16.mxu0 0
  %122 = vmatmul.mubr.bf16.gmra.mxu0 %v68
  %v123 = vpop.f32.mrf.mxu0
  %v124 = vadd.f32 %v33, %v123
  %v125 = vpop.f32.mrf.mxu0
  %v126 = vpop.f32.mrf.mxu0
  %v127 = vadd.f32 %v33, %v126
  %v128 = vpop.f32.mrf.mxu0
  %129 = vmatprep.mubr.bf16.mxu0 0
  %130 = vmatmul.mubr.bf16.gmra.mxu0 %v71
  %v131 = vpop.f32.mrf.mxu0
  %v132 = vadd.f32 %v33, %v131
  %v133 = vpop.f32.mrf.mxu0
  %v134 = vpop.f32.mrf.mxu0
  %v135 = vadd.f32 %v33, %v134
  %v136 = vpop.f32.mrf.mxu0
  %137 = vdwg.mxu0
  %v142 = vunpack.c.l.b16 %v25
  %v143 = vunpack.c.l.b16 %v26
  %v144 = vunpack.c.l.b16 %v27
  %v145 = vunpack.c.l.b16 %v28
  %v146 = vpack.c.b16 %v143, %v142
  %v147 = vpack.c.b16 %v145, %v144
  %vm150 = vcmask 261120
  %v152 = vsel %vm150, 0, 0
  %154 = vmatprep.subr.bf16.mxu0 0
  %155 = vmatpush1.bf16.msra.mxu0 0
  %156 = vmatprep.subr.bf16.mxu0 0
  %157 = vmatpush1.bf16.msra.mxu0 0
  %158 = vmatprep.subr.bf16.mxu0 0
  %159 = vmatpush1.bf16.msra.mxu0 0
  %160 = vmatprep.subr.bf16.mxu0 0
  %161 = vmatpush1.bf16.msra.mxu0 0
  %162 = vmatprep.subr.bf16.mxu0 0
  %163 = vmatpush1.bf16.msra.mxu0 0
  %164 = vmatprep.subr.bf16.mxu0 0
  %165 = vmatpush1.bf16.msra.mxu0 0
  %166 = vmatprep.subr.bf16.mxu0 0
  %167 = vmatpush1.bf16.msra.mxu0 %v147
  %168 = vmatprep.subr.bf16.mxu0 0
  %169 = vmatpush1.bf16.msra.mxu0 %v146
  %170 = vmatprep.subr.bf16.mxu0 0
  %171 = vmatpush2.bf16.msra.mxu0 0
  %172 = vmatprep.subr.bf16.mxu0 0
  %173 = vmatpush2.bf16.msra.mxu0 0
  %174 = vmatprep.subr.bf16.mxu0 0
  %175 = vmatpush2.bf16.msra.mxu0 0
  %176 = vmatprep.subr.bf16.mxu0 0
  %177 = vmatpush2.bf16.msra.mxu0 0
  %178 = vmatprep.subr.bf16.mxu0 0
  %179 = vmatpush2.bf16.msra.mxu0 0
  %180 = vmatprep.subr.bf16.mxu0 0
  %181 = vmatpush2.bf16.msra.mxu0 0
  %182 = vmatprep.subr.bf16.mxu0 0
  %183 = vmatpush2.bf16.msra.mxu0 0
  %184 = vmatprep.subr.bf16.mxu0 0
  %185 = vmatpush2.bf16.msra.mxu0 0
  %186 = vmatprep.mubr.bf16.mxu0 0
  %187 = vmatmul.mubr.bf16.gmra.mxu0 %v152
  %v188 = vpop.f32.mrf.mxu0
  %v189 = vadd.f32 0.0, %v188
  %v190 = vpop.f32.mrf.mxu0
  %v191 = vpop.f32.mrf.mxu0
  %v192 = vpop.f32.mrf.mxu0
  %193 = vdwg.mxu0
  %v194 = vadd.f32 %v108, %v189
  %v195 = vxor.u32 %v194, 2147483648
  %v196 = vmul.f32 %v195, 1.442695
  %v197 = vpow.pop %v196
  %v198 = vadd.f32 %v197, 1.0
  %v199 = vrcp.pop %v198
  %v200 = vmul.f32 1.0, %v199
  %v201 = vtanh.pop %v194
  %v202 = vmul.f32 %v200, 0.0
  %204 = vrot.lane.b32.xlu0 %v201, 32
  %v205 = vpop.permute.xlu0 %204
  %v207 = vmul.f32 %v200, %v205
  %209 = vrot.lane.b32.xlu0 %v207, 32
  %v210 = vpop.permute.xlu0 %209
  %v212 = vadd.f32 %v202, %v210
  %v213 = vtanh.pop %v212
  %215 = vrot.lane.b32.xlu0 %v213, 32
  %v216 = vpop.permute.xlu0 %215
  %v218 = vmul.f32 %v200, %v216
  %v219 = vpack.c.bf16 %v218, %v218
  %221 = vrot.lane.b32.xlu0 %v219, 64
  %v222 = vpop.permute.xlu0 %221
  %v224 = vsel %vm150, %v222, 0
  %226 = vmatprep.subr.bf16.mxu0 0
  %227 = vmatpush1.bf16.msra.mxu0 0
  %228 = vmatprep.subr.bf16.mxu0 0
  %229 = vmatpush1.bf16.msra.mxu0 0
  %230 = vmatprep.subr.bf16.mxu0 0
  %231 = vmatpush1.bf16.msra.mxu0 0
  %232 = vmatprep.subr.bf16.mxu0 0
  %233 = vmatpush1.bf16.msra.mxu0 0
  %234 = vmatprep.subr.bf16.mxu0 0
  %235 = vmatpush1.bf16.msra.mxu0 0
  %236 = vmatprep.subr.bf16.mxu0 0
  %237 = vmatpush1.bf16.msra.mxu0 0
  %238 = vmatprep.subr.bf16.mxu0 0
  %239 = vmatpush1.bf16.msra.mxu0 %v147
  %240 = vmatprep.subr.bf16.mxu0 0
  %241 = vmatpush1.bf16.msra.mxu0 %v146
  %242 = vmatprep.subr.bf16.mxu0 0
  %243 = vmatpush2.bf16.msra.mxu0 0
  %244 = vmatprep.subr.bf16.mxu0 0
  %245 = vmatpush2.bf16.msra.mxu0 0
  %246 = vmatprep.subr.bf16.mxu0 0
  %247 = vmatpush2.bf16.msra.mxu0 0
  %248 = vmatprep.subr.bf16.mxu0 0
  %249 = vmatpush2.bf16.msra.mxu0 0
  %250 = vmatprep.subr.bf16.mxu0 0
  %251 = vmatpush2.bf16.msra.mxu0 0
  %252 = vmatprep.subr.bf16.mxu0 0
  %253 = vmatpush2.bf16.msra.mxu0 0
  %254 = vmatprep.subr.bf16.mxu0 0
  %255 = vmatpush2.bf16.msra.mxu0 0
  %256 = vmatprep.subr.bf16.mxu0 0
  %257 = vmatpush2.bf16.msra.mxu0 0
  %258 = vmatprep.mubr.bf16.mxu0 0
  %259 = vmatmul.mubr.bf16.gmra.mxu0 %v224
  %v260 = vpop.f32.mrf.mxu0
  %v261 = vadd.f32 0.0, %v260
  %v262 = vpop.f32.mrf.mxu0
  %v263 = vpop.f32.mrf.mxu0
  %v264 = vpop.f32.mrf.mxu0
  %265 = vdwg.mxu0
  %v266 = vadd.f32 %v111, %v261
  %v267 = vxor.u32 %v266, 2147483648
  %v268 = vmul.f32 %v267, 1.442695
  %v269 = vpow.pop %v268
  %v270 = vadd.f32 %v269, 1.0
  %v271 = vrcp.pop %v270
  %v272 = vmul.f32 1.0, %v271
  %v273 = vtanh.pop %v266
  %v274 = vmul.f32 %v272, %v212
  %276 = vrot.lane.b32.xlu0 %v273, 32
  %v277 = vpop.permute.xlu0 %276
  %v279 = vmul.f32 %v272, %v277
  %281 = vrot.lane.b32.xlu0 %v279, 32
  %v282 = vpop.permute.xlu0 %281
  %v284 = vadd.f32 %v274, %v282
  %v285 = vtanh.pop %v284
  %287 = vrot.lane.b32.xlu0 %v285, 32
  %v288 = vpop.permute.xlu0 %287
  %v290 = vmul.f32 %v272, %v288
  %v291 = vpack.c.bf16 %v290, %v290
  %293 = vrot.lane.b32.xlu0 %v291, 64
  %v294 = vpop.permute.xlu0 %293
  %v296 = vsel %vm150, %v294, 0
  %298 = vmatprep.subr.bf16.mxu0 0
  %299 = vmatpush1.bf16.msra.mxu0 0
  %300 = vmatprep.subr.bf16.mxu0 0
  %301 = vmatpush1.bf16.msra.mxu0 0
  %302 = vmatprep.subr.bf16.mxu0 0
  %303 = vmatpush1.bf16.msra.mxu0 0
  %304 = vmatprep.subr.bf16.mxu0 0
  %305 = vmatpush1.bf16.msra.mxu0 0
  %306 = vmatprep.subr.bf16.mxu0 0
  %307 = vmatpush1.bf16.msra.mxu0 0
  %308 = vmatprep.subr.bf16.mxu0 0
  %309 = vmatpush1.bf16.msra.mxu0 0
  %310 = vmatprep.subr.bf16.mxu0 0
  %311 = vmatpush1.bf16.msra.mxu0 %v147
  %312 = vmatprep.subr.bf16.mxu0 0
  %313 = vmatpush1.bf16.msra.mxu0 %v146
  %314 = vmatprep.subr.bf16.mxu0 0
  %315 = vmatpush2.bf16.msra.mxu0 0
  %316 = vmatprep.subr.bf16.mxu0 0
  %317 = vmatpush2.bf16.msra.mxu0 0
  %318 = vmatprep.subr.bf16.mxu0 0
  %319 = vmatpush2.bf16.msra.mxu0 0
  %320 = vmatprep.subr.bf16.mxu0 0
  %321 = vmatpush2.bf16.msra.mxu0 0
  %322 = vmatprep.subr.bf16.mxu0 0
  %323 = vmatpush2.bf16.msra.mxu0 0
  %324 = vmatprep.subr.bf16.mxu0 0
  %325 = vmatpush2.bf16.msra.mxu0 0
  %326 = vmatprep.subr.bf16.mxu0 0
  %327 = vmatpush2.bf16.msra.mxu0 0
  %328 = vmatprep.subr.bf16.mxu0 0
  %329 = vmatpush2.bf16.msra.mxu0 0
  %330 = vmatprep.mubr.bf16.mxu0 0
  %331 = vmatmul.mubr.bf16.gmra.mxu0 %v296
  %v332 = vpop.f32.mrf.mxu0
  %v333 = vadd.f32 0.0, %v332
  %v334 = vpop.f32.mrf.mxu0
  %v335 = vpop.f32.mrf.mxu0
  %v336 = vpop.f32.mrf.mxu0
  %337 = vdwg.mxu0
  %v338 = vadd.f32 %v116, %v333
  %v339 = vxor.u32 %v338, 2147483648
  %v340 = vmul.f32 %v339, 1.442695
  %v341 = vpow.pop %v340
  %v342 = vadd.f32 %v341, 1.0
  %v343 = vrcp.pop %v342
  %v344 = vmul.f32 1.0, %v343
  %v345 = vtanh.pop %v338
  %v346 = vmul.f32 %v344, %v284
  %348 = vrot.lane.b32.xlu0 %v345, 32
  %v349 = vpop.permute.xlu0 %348
  %v351 = vmul.f32 %v344, %v349
  %353 = vrot.lane.b32.xlu0 %v351, 32
  %v354 = vpop.permute.xlu0 %353
  %v356 = vadd.f32 %v346, %v354
  %v357 = vtanh.pop %v356
  %359 = vrot.lane.b32.xlu0 %v357, 32
  %v360 = vpop.permute.xlu0 %359
  %v362 = vmul.f32 %v344, %v360
  %v363 = vpack.c.bf16 %v362, %v362
  %365 = vrot.lane.b32.xlu0 %v363, 64
  %v366 = vpop.permute.xlu0 %365
  %v368 = vsel %vm150, %v366, 0
  %370 = vmatprep.subr.bf16.mxu0 0
  %371 = vmatpush1.bf16.msra.mxu0 0
  %372 = vmatprep.subr.bf16.mxu0 0
  %373 = vmatpush1.bf16.msra.mxu0 0
  %374 = vmatprep.subr.bf16.mxu0 0
  %375 = vmatpush1.bf16.msra.mxu0 0
  %376 = vmatprep.subr.bf16.mxu0 0
  %377 = vmatpush1.bf16.msra.mxu0 0
  %378 = vmatprep.subr.bf16.mxu0 0
  %379 = vmatpush1.bf16.msra.mxu0 0
  %380 = vmatprep.subr.bf16.mxu0 0
  %381 = vmatpush1.bf16.msra.mxu0 0
  %382 = vmatprep.subr.bf16.mxu0 0
  %383 = vmatpush1.bf16.msra.mxu0 %v147
  %384 = vmatprep.subr.bf16.mxu0 0
  %385 = vmatpush1.bf16.msra.mxu0 %v146
  %386 = vmatprep.subr.bf16.mxu0 0
  %387 = vmatpush2.bf16.msra.mxu0 0
  %388 = vmatprep.subr.bf16.mxu0 0
  %389 = vmatpush2.bf16.msra.mxu0 0
  %390 = vmatprep.subr.bf16.mxu0 0
  %391 = vmatpush2.bf16.msra.mxu0 0
  %392 = vmatprep.subr.bf16.mxu0 0
  %393 = vmatpush2.bf16.msra.mxu0 0
  %394 = vmatprep.subr.bf16.mxu0 0
  %395 = vmatpush2.bf16.msra.mxu0 0
  %396 = vmatprep.subr.bf16.mxu0 0
  %397 = vmatpush2.bf16.msra.mxu0 0
  %398 = vmatprep.subr.bf16.mxu0 0
  %399 = vmatpush2.bf16.msra.mxu0 0
  %400 = vmatprep.subr.bf16.mxu0 0
  %401 = vmatpush2.bf16.msra.mxu0 0
  %402 = vmatprep.mubr.bf16.mxu0 0
  %403 = vmatmul.mubr.bf16.gmra.mxu0 %v368
  %v404 = vpop.f32.mrf.mxu0
  %v405 = vadd.f32 0.0, %v404
  %v406 = vpop.f32.mrf.mxu0
  %v407 = vpop.f32.mrf.mxu0
  %v408 = vpop.f32.mrf.mxu0
  %409 = vdwg.mxu0
  %v410 = vadd.f32 %v119, %v405
  %v411 = vxor.u32 %v410, 2147483648
  %v412 = vmul.f32 %v411, 1.442695
  %v413 = vpow.pop %v412
  %v414 = vadd.f32 %v413, 1.0
  %v415 = vrcp.pop %v414
  %v416 = vmul.f32 1.0, %v415
  %v417 = vtanh.pop %v410
  %v418 = vmul.f32 %v416, %v356
  %420 = vrot.lane.b32.xlu0 %v417, 32
  %v421 = vpop.permute.xlu0 %420
  %v423 = vmul.f32 %v416, %v421
  %425 = vrot.lane.b32.xlu0 %v423, 32
  %v426 = vpop.permute.xlu0 %425
  %v428 = vadd.f32 %v418, %v426
  %v429 = vtanh.pop %v428
  %431 = vrot.lane.b32.xlu0 %v429, 32
  %v432 = vpop.permute.xlu0 %431
  %v434 = vmul.f32 %v416, %v432
  %v435 = vpack.c.bf16 %v434, %v434
  %437 = vrot.lane.b32.xlu0 %v435, 64
  %v438 = vpop.permute.xlu0 %437
  %v440 = vsel %vm150, %v438, 0
  %442 = vmatprep.subr.bf16.mxu0 0
  %443 = vmatpush1.bf16.msra.mxu0 0
  %444 = vmatprep.subr.bf16.mxu0 0
  %445 = vmatpush1.bf16.msra.mxu0 0
  %446 = vmatprep.subr.bf16.mxu0 0
  %447 = vmatpush1.bf16.msra.mxu0 0
  %448 = vmatprep.subr.bf16.mxu0 0
  %449 = vmatpush1.bf16.msra.mxu0 0
  %450 = vmatprep.subr.bf16.mxu0 0
  %451 = vmatpush1.bf16.msra.mxu0 0
  %452 = vmatprep.subr.bf16.mxu0 0
  %453 = vmatpush1.bf16.msra.mxu0 0
  %454 = vmatprep.subr.bf16.mxu0 0
  %455 = vmatpush1.bf16.msra.mxu0 %v147
  %456 = vmatprep.subr.bf16.mxu0 0
  %457 = vmatpush1.bf16.msra.mxu0 %v146
  %458 = vmatprep.subr.bf16.mxu0 0
  %459 = vmatpush2.bf16.msra.mxu0 0
  %460 = vmatprep.subr.bf16.mxu0 0
  %461 = vmatpush2.bf16.msra.mxu0 0
  %462 = vmatprep.subr.bf16.mxu0 0
  %463 = vmatpush2.bf16.msra.mxu0 0
  %464 = vmatprep.subr.bf16.mxu0 0
  %465 = vmatpush2.bf16.msra.mxu0 0
  %466 = vmatprep.subr.bf16.mxu0 0
  %467 = vmatpush2.bf16.msra.mxu0 0
  %468 = vmatprep.subr.bf16.mxu0 0
  %469 = vmatpush2.bf16.msra.mxu0 0
  %470 = vmatprep.subr.bf16.mxu0 0
  %471 = vmatpush2.bf16.msra.mxu0 0
  %472 = vmatprep.subr.bf16.mxu0 0
  %473 = vmatpush2.bf16.msra.mxu0 0
  %474 = vmatprep.mubr.bf16.mxu0 0
  %475 = vmatmul.mubr.bf16.gmra.mxu0 %v440
  %v476 = vpop.f32.mrf.mxu0
  %v477 = vadd.f32 0.0, %v476
  %v478 = vpop.f32.mrf.mxu0
  %v479 = vpop.f32.mrf.mxu0
  %v480 = vpop.f32.mrf.mxu0
  %481 = vdwg.mxu0
  %v482 = vadd.f32 %v124, %v477
  %v483 = vxor.u32 %v482, 2147483648
  %v484 = vmul.f32 %v483, 1.442695
  %v485 = vpow.pop %v484
  %v486 = vadd.f32 %v485, 1.0
  %v487 = vrcp.pop %v486
  %v488 = vmul.f32 1.0, %v487
  %v489 = vtanh.pop %v482
  %v490 = vmul.f32 %v488, %v428
  %492 = vrot.lane.b32.xlu0 %v489, 32
  %v493 = vpop.permute.xlu0 %492
  %v495 = vmul.f32 %v488, %v493
  %497 = vrot.lane.b32.xlu0 %v495, 32
  %v498 = vpop.permute.xlu0 %497
  %v500 = vadd.f32 %v490, %v498
  %v501 = vtanh.pop %v500
  %503 = vrot.lane.b32.xlu0 %v501, 32
  %v504 = vpop.permute.xlu0 %503
  %v506 = vmul.f32 %v488, %v504
  %v507 = vpack.c.bf16 %v506, %v506
  %509 = vrot.lane.b32.xlu0 %v507, 64
  %v510 = vpop.permute.xlu0 %509
  %v512 = vsel %vm150, %v510, 0
  %514 = vmatprep.subr.bf16.mxu0 0
  %515 = vmatpush1.bf16.msra.mxu0 0
  %516 = vmatprep.subr.bf16.mxu0 0
  %517 = vmatpush1.bf16.msra.mxu0 0
  %518 = vmatprep.subr.bf16.mxu0 0
  %519 = vmatpush1.bf16.msra.mxu0 0
  %520 = vmatprep.subr.bf16.mxu0 0
  %521 = vmatpush1.bf16.msra.mxu0 0
  %522 = vmatprep.subr.bf16.mxu0 0
  %523 = vmatpush1.bf16.msra.mxu0 0
  %524 = vmatprep.subr.bf16.mxu0 0
  %525 = vmatpush1.bf16.msra.mxu0 0
  %526 = vmatprep.subr.bf16.mxu0 0
  %527 = vmatpush1.bf16.msra.mxu0 %v147
  %528 = vmatprep.subr.bf16.mxu0 0
  %529 = vmatpush1.bf16.msra.mxu0 %v146
  %530 = vmatprep.subr.bf16.mxu0 0
  %531 = vmatpush2.bf16.msra.mxu0 0
  %532 = vmatprep.subr.bf16.mxu0 0
  %533 = vmatpush2.bf16.msra.mxu0 0
  %534 = vmatprep.subr.bf16.mxu0 0
  %535 = vmatpush2.bf16.msra.mxu0 0
  %536 = vmatprep.subr.bf16.mxu0 0
  %537 = vmatpush2.bf16.msra.mxu0 0
  %538 = vmatprep.subr.bf16.mxu0 0
  %539 = vmatpush2.bf16.msra.mxu0 0
  %540 = vmatprep.subr.bf16.mxu0 0
  %541 = vmatpush2.bf16.msra.mxu0 0
  %542 = vmatprep.subr.bf16.mxu0 0
  %543 = vmatpush2.bf16.msra.mxu0 0
  %544 = vmatprep.subr.bf16.mxu0 0
  %545 = vmatpush2.bf16.msra.mxu0 0
  %546 = vmatprep.mubr.bf16.mxu0 0
  %547 = vmatmul.mubr.bf16.gmra.mxu0 %v512
  %v548 = vpop.f32.mrf.mxu0
  %v549 = vadd.f32 0.0, %v548
  %v550 = vpop.f32.mrf.mxu0
  %v551 = vpop.f32.mrf.mxu0
  %v552 = vpop.f32.mrf.mxu0
  %553 = vdwg.mxu0
  %v554 = vadd.f32 %v127, %v549
  %v555 = vxor.u32 %v554, 2147483648
  %v556 = vmul.f32 %v555, 1.442695
  %v557 = vpow.pop %v556
  %v558 = vadd.f32 %v557, 1.0
  %v559 = vrcp.pop %v558
  %v560 = vmul.f32 1.0, %v559
  %v561 = vtanh.pop %v554
  %v562 = vmul.f32 %v560, %v500
  %564 = vrot.lane.b32.xlu0 %v561, 32
  %v565 = vpop.permute.xlu0 %564
  %v567 = vmul.f32 %v560, %v565
  %569 = vrot.lane.b32.xlu0 %v567, 32
  %v570 = vpop.permute.xlu0 %569
  %v572 = vadd.f32 %v562, %v570
  %v573 = vtanh.pop %v572
  %575 = vrot.lane.b32.xlu0 %v573, 32
  %v576 = vpop.permute.xlu0 %575
  %v578 = vmul.f32 %v560, %v576
  %v579 = vpack.c.bf16 %v578, %v578
  %581 = vrot.lane.b32.xlu0 %v579, 64
  %v582 = vpop.permute.xlu0 %581
  %v584 = vsel %vm150, %v582, 0
  %586 = vmatprep.subr.bf16.mxu0 0
  %587 = vmatpush1.bf16.msra.mxu0 0
  %588 = vmatprep.subr.bf16.mxu0 0
  %589 = vmatpush1.bf16.msra.mxu0 0
  %590 = vmatprep.subr.bf16.mxu0 0
  %591 = vmatpush1.bf16.msra.mxu0 0
  %592 = vmatprep.subr.bf16.mxu0 0
  %593 = vmatpush1.bf16.msra.mxu0 0
  %594 = vmatprep.subr.bf16.mxu0 0
  %595 = vmatpush1.bf16.msra.mxu0 0
  %596 = vmatprep.subr.bf16.mxu0 0
  %597 = vmatpush1.bf16.msra.mxu0 0
  %598 = vmatprep.subr.bf16.mxu0 0
  %599 = vmatpush1.bf16.msra.mxu0 %v147
  %600 = vmatprep.subr.bf16.mxu0 0
  %601 = vmatpush1.bf16.msra.mxu0 %v146
  %602 = vmatprep.subr.bf16.mxu0 0
  %603 = vmatpush2.bf16.msra.mxu0 0
  %604 = vmatprep.subr.bf16.mxu0 0
  %605 = vmatpush2.bf16.msra.mxu0 0
  %606 = vmatprep.subr.bf16.mxu0 0
  %607 = vmatpush2.bf16.msra.mxu0 0
  %608 = vmatprep.subr.bf16.mxu0 0
  %609 = vmatpush2.bf16.msra.mxu0 0
  %610 = vmatprep.subr.bf16.mxu0 0
  %611 = vmatpush2.bf16.msra.mxu0 0
  %612 = vmatprep.subr.bf16.mxu0 0
  %613 = vmatpush2.bf16.msra.mxu0 0
  %614 = vmatprep.subr.bf16.mxu0 0
  %615 = vmatpush2.bf16.msra.mxu0 0
  %616 = vmatprep.subr.bf16.mxu0 0
  %617 = vmatpush2.bf16.msra.mxu0 0
  %618 = vmatprep.mubr.bf16.mxu0 0
  %619 = vmatmul.mubr.bf16.gmra.mxu0 %v584
  %v620 = vpop.f32.mrf.mxu0
  %v621 = vadd.f32 0.0, %v620
  %v622 = vpop.f32.mrf.mxu0
  %v623 = vpop.f32.mrf.mxu0
  %v624 = vpop.f32.mrf.mxu0
  %625 = vdwg.mxu0
  %v626 = vadd.f32 %v132, %v621
  %v627 = vxor.u32 %v626, 2147483648
  %v628 = vmul.f32 %v627, 1.442695
  %v629 = vpow.pop %v628
  %v630 = vadd.f32 %v629, 1.0
  %v631 = vrcp.pop %v630
  %v632 = vmul.f32 1.0, %v631
  %v633 = vtanh.pop %v626
  %v634 = vmul.f32 %v632, %v572
  %636 = vrot.lane.b32.xlu0 %v633, 32
  %v637 = vpop.permute.xlu0 %636
  %v639 = vmul.f32 %v632, %v637
  %641 = vrot.lane.b32.xlu0 %v639, 32
  %v642 = vpop.permute.xlu0 %641
  %v644 = vadd.f32 %v634, %v642
  %v645 = vtanh.pop %v644
  %647 = vrot.lane.b32.xlu0 %v645, 32
  %v648 = vpop.permute.xlu0 %647
  %v650 = vmul.f32 %v632, %v648
  %v651 = vpack.c.bf16 %v650, %v650
  %653 = vrot.lane.b32.xlu0 %v651, 64
  %v654 = vpop.permute.xlu0 %653
  %v656 = vsel %vm150, %v654, 0
  %658 = vmatprep.subr.bf16.mxu0 0
  %659 = vmatpush1.bf16.msra.mxu0 0
  %660 = vmatprep.subr.bf16.mxu0 0
  %661 = vmatpush1.bf16.msra.mxu0 0
  %662 = vmatprep.subr.bf16.mxu0 0
  %663 = vmatpush1.bf16.msra.mxu0 0
  %664 = vmatprep.subr.bf16.mxu0 0
  %665 = vmatpush1.bf16.msra.mxu0 0
  %666 = vmatprep.subr.bf16.mxu0 0
  %667 = vmatpush1.bf16.msra.mxu0 0
  %668 = vmatprep.subr.bf16.mxu0 0
  %669 = vmatpush1.bf16.msra.mxu0 0
  %670 = vmatprep.subr.bf16.mxu0 0
  %671 = vmatpush1.bf16.msra.mxu0 %v147
  %672 = vmatprep.subr.bf16.mxu0 0
  %673 = vmatpush1.bf16.msra.mxu0 %v146
  %674 = vmatprep.subr.bf16.mxu0 0
  %675 = vmatpush2.bf16.msra.mxu0 0
  %676 = vmatprep.subr.bf16.mxu0 0
  %677 = vmatpush2.bf16.msra.mxu0 0
  %678 = vmatprep.subr.bf16.mxu0 0
  %679 = vmatpush2.bf16.msra.mxu0 0
  %680 = vmatprep.subr.bf16.mxu0 0
  %681 = vmatpush2.bf16.msra.mxu0 0
  %682 = vmatprep.subr.bf16.mxu0 0
  %683 = vmatpush2.bf16.msra.mxu0 0
  %684 = vmatprep.subr.bf16.mxu0 0
  %685 = vmatpush2.bf16.msra.mxu0 0
  %686 = vmatprep.subr.bf16.mxu0 0
  %687 = vmatpush2.bf16.msra.mxu0 0
  %688 = vmatprep.subr.bf16.mxu0 0
  %689 = vmatpush2.bf16.msra.mxu0 0
  %690 = vmatprep.mubr.bf16.mxu0 0
  %691 = vmatmul.mubr.bf16.gmra.mxu0 %v656
  %v692 = vpop.f32.mrf.mxu0
  %v693 = vadd.f32 0.0, %v692
  %v694 = vpop.f32.mrf.mxu0
  %v695 = vpop.f32.mrf.mxu0
  %v696 = vpop.f32.mrf.mxu0
  %697 = vdwg.mxu0
  %v698 = vadd.f32 %v135, %v693
  %v699 = vxor.u32 %v698, 2147483648
  %v700 = vmul.f32 %v699, 1.442695
  %v701 = vpow.pop %v700
  %v702 = vadd.f32 %v701, 1.0
  %v703 = vrcp.pop %v702
  %v704 = vmul.f32 1.0, %v703
  %v705 = vtanh.pop %v698
  %v706 = vmul.f32 %v704, %v644
  %708 = vrot.lane.b32.xlu0 %v705, 32
  %v709 = vpop.permute.xlu0 %708
  %v711 = vmul.f32 %v704, %v709
  %713 = vrot.lane.b32.xlu0 %v711, 32
  %v714 = vpop.permute.xlu0 %713
  %v716 = vadd.f32 %v706, %v714
  %v717 = vtanh.pop %v716
  %719 = vrot.lane.b32.xlu0 %v717, 32
  %v720 = vpop.permute.xlu0 %719
  %v722 = vmul.f32 %v704, %v720
  %v723 = vpack.c.bf16 %v722, %v722
  %v724 = vrot.slane %v291, 4
  %v725 = vrot.slane %v435, 4
  %v726 = vrot.slane %v579, 4
  %v728 = vrot.slane %v723, 4
  %vm729 = vcmask 1043456
  %v732 = vsel %vm729, %v219, %v724
  %v735 = vsel %vm729, %v363, %v725
  %v738 = vsel %vm729, %v507, %v726
  %v741 = vsel %vm729, %v651, %v728
  %v742 = vld [vmem:[%s1 + $0x18] sm:$0xf]
  %v743 = vld [vmem:[%s1 + $0x1c] sm:$0xf]
  %v744 = vld [vmem:[%s1 + $0x20] sm:$0xf]
  %v745 = vld [vmem:[%s1 + $0x24] sm:$0xf]
  %v746 = vld [vmem:[%s1 + $0x28] sm:$0xf]
  %v747 = vld [vmem:[%s1 + $0x2c] sm:$0xf]
  %v748 = vld [vmem:[%s1 + $0x30] sm:$0xf]
  %v749 = vld [vmem:[%s1 + $0x34] sm:$0xf]
  %v750 = vld [vmem:[%s2 + $0x1] sm:$0x1]
  %v751 = vlaneseq
  %v752 = vshrl.u32 %v751, 7
  %v753 = vsub.s32 0, %v752
  %v754 = vrot.slane %v750, %v753
  %759 = vrot.lane.b32.xlu0 %v732, 64
  %v760 = vpop.permute.xlu0 %759
  %761 = vrot.lane.b32.xlu0 %v735, 64
  %v762 = vpop.permute.xlu0 %761
  %763 = vrot.lane.b32.xlu0 %v738, 64
  %v764 = vpop.permute.xlu0 %763
  %765 = vrot.lane.b32.xlu0 %v741, 64
  %v766 = vpop.permute.xlu0 %765
  %v771 = vunpack.c.l.b16 %v742
  %v772 = vunpack.c.l.b16 %v743
  %v773 = vunpack.c.l.b16 %v744
  %v774 = vunpack.c.l.b16 %v745
  %v775 = vpack.c.b16 %v772, %v771
  %v776 = vpack.c.b16 %v774, %v773
  %v780 = vsel %vm150, %v760, 0
  %v783 = vsel %vm150, %v762, 0
  %v786 = vsel %vm150, %v764, 0
  %v789 = vsel %vm150, %v766, 0
  %791 = vmatprep.subr.bf16.mxu0 0
  %792 = vmatpush1.bf16.msra.mxu0 0
  %793 = vmatprep.subr.bf16.mxu0 0
  %794 = vmatpush1.bf16.msra.mxu0 0
  %795 = vmatprep.subr.bf16.mxu0 0
  %796 = vmatpush1.bf16.msra.mxu0 0
  %797 = vmatprep.subr.bf16.mxu0 0
  %798 = vmatpush1.bf16.msra.mxu0 0
  %799 = vmatprep.subr.bf16.mxu0 0
  %800 = vmatpush1.bf16.msra.mxu0 0
  %801 = vmatprep.subr.bf16.mxu0 0
  %802 = vmatpush1.bf16.msra.mxu0 0
  %803 = vmatprep.subr.bf16.mxu0 0
  %804 = vmatpush1.bf16.msra.mxu0 %v776
  %805 = vmatprep.subr.bf16.mxu0 0
  %806 = vmatpush1.bf16.msra.mxu0 %v775
  %807 = vmatprep.subr.bf16.mxu0 0
  %808 = vmatpush2.bf16.msra.mxu0 0
  %809 = vmatprep.subr.bf16.mxu0 0
  %810 = vmatpush2.bf16.msra.mxu0 0
  %811 = vmatprep.subr.bf16.mxu0 0
  %812 = vmatpush2.bf16.msra.mxu0 0
  %813 = vmatprep.subr.bf16.mxu0 0
  %814 = vmatpush2.bf16.msra.mxu0 0
  %815 = vmatprep.subr.bf16.mxu0 0
  %816 = vmatpush2.bf16.msra.mxu0 0
  %817 = vmatprep.subr.bf16.mxu0 0
  %818 = vmatpush2.bf16.msra.mxu0 0
  %819 = vmatprep.subr.bf16.mxu0 0
  %820 = vmatpush2.bf16.msra.mxu0 0
  %821 = vmatprep.subr.bf16.mxu0 0
  %822 = vmatpush2.bf16.msra.mxu0 0
  %823 = vmatprep.mubr.bf16.mxu0 0
  %824 = vmatmul.mubr.bf16.gmra.mxu0 %v780
  %v825 = vpop.f32.mrf.mxu0
  %v826 = vadd.f32 %v754, %v825
  %v827 = vpop.f32.mrf.mxu0
  %v828 = vpop.f32.mrf.mxu0
  %v829 = vadd.f32 %v754, %v828
  %v830 = vpop.f32.mrf.mxu0
  %831 = vmatprep.mubr.bf16.mxu0 0
  %832 = vmatmul.mubr.bf16.gmra.mxu0 %v783
  %v833 = vpop.f32.mrf.mxu0
  %v834 = vadd.f32 %v754, %v833
  %v835 = vpop.f32.mrf.mxu0
  %v836 = vpop.f32.mrf.mxu0
  %v837 = vadd.f32 %v754, %v836
  %v838 = vpop.f32.mrf.mxu0
  %839 = vmatprep.mubr.bf16.mxu0 0
  %840 = vmatmul.mubr.bf16.gmra.mxu0 %v786
  %v841 = vpop.f32.mrf.mxu0
  %v842 = vadd.f32 %v754, %v841
  %v843 = vpop.f32.mrf.mxu0
  %v844 = vpop.f32.mrf.mxu0
  %v845 = vadd.f32 %v754, %v844
  %v846 = vpop.f32.mrf.mxu0
  %847 = vmatprep.mubr.bf16.mxu0 0
  %848 = vmatmul.mubr.bf16.gmra.mxu0 %v789
  %v849 = vpop.f32.mrf.mxu0
  %v850 = vadd.f32 %v754, %v849
  %v851 = vpop.f32.mrf.mxu0
  %v852 = vpop.f32.mrf.mxu0
  %v853 = vadd.f32 %v754, %v852
  %v854 = vpop.f32.mrf.mxu0
  %855 = vdwg.mxu0
  %v860 = vunpack.c.l.b16 %v746
  %v861 = vunpack.c.l.b16 %v747
  %v862 = vunpack.c.l.b16 %v748
  %v863 = vunpack.c.l.b16 %v749
  %v864 = vpack.c.b16 %v861, %v860
  %v865 = vpack.c.b16 %v863, %v862
  %868 = vmatprep.subr.bf16.mxu0 0
  %869 = vmatpush1.bf16.msra.mxu0 0
  %870 = vmatprep.subr.bf16.mxu0 0
  %871 = vmatpush1.bf16.msra.mxu0 0
  %872 = vmatprep.subr.bf16.mxu0 0
  %873 = vmatpush1.bf16.msra.mxu0 0
  %874 = vmatprep.subr.bf16.mxu0 0
  %875 = vmatpush1.bf16.msra.mxu0 0
  %876 = vmatprep.subr.bf16.mxu0 0
  %877 = vmatpush1.bf16.msra.mxu0 0
  %878 = vmatprep.subr.bf16.mxu0 0
  %879 = vmatpush1.bf16.msra.mxu0 0
  %880 = vmatprep.subr.bf16.mxu0 0
  %881 = vmatpush1.bf16.msra.mxu0 %v865
  %882 = vmatprep.subr.bf16.mxu0 0
  %883 = vmatpush1.bf16.msra.mxu0 %v864
  %884 = vmatprep.subr.bf16.mxu0 0
  %885 = vmatpush2.bf16.msra.mxu0 0
  %886 = vmatprep.subr.bf16.mxu0 0
  %887 = vmatpush2.bf16.msra.mxu0 0
  %888 = vmatprep.subr.bf16.mxu0 0
  %889 = vmatpush2.bf16.msra.mxu0 0
  %890 = vmatprep.subr.bf16.mxu0 0
  %891 = vmatpush2.bf16.msra.mxu0 0
  %892 = vmatprep.subr.bf16.mxu0 0
  %893 = vmatpush2.bf16.msra.mxu0 0
  %894 = vmatprep.subr.bf16.mxu0 0
  %895 = vmatpush2.bf16.msra.mxu0 0
  %896 = vmatprep.subr.bf16.mxu0 0
  %897 = vmatpush2.bf16.msra.mxu0 0
  %898 = vmatprep.subr.bf16.mxu0 0
  %899 = vmatpush2.bf16.msra.mxu0 0
  %900 = vmatprep.mubr.bf16.mxu0 0
  %901 = vmatmul.mubr.bf16.gmra.mxu0 %v152
  %v902 = vpop.f32.mrf.mxu0
  %v903 = vadd.f32 0.0, %v902
  %v904 = vpop.f32.mrf.mxu0
  %v905 = vpop.f32.mrf.mxu0
  %v906 = vpop.f32.mrf.mxu0
  %907 = vdwg.mxu0
  %v908 = vadd.f32 %v826, %v903
  %v909 = vxor.u32 %v908, 2147483648
  %v910 = vmul.f32 %v909, 1.442695
  %v911 = vpow.pop %v910
  %v912 = vadd.f32 %v911, 1.0
  %v913 = vrcp.pop %v912
  %v914 = vmul.f32 1.0, %v913
  %v915 = vtanh.pop %v908
  %v916 = vmul.f32 %v914, 0.0
  %918 = vrot.lane.b32.xlu0 %v915, 32
  %v919 = vpop.permute.xlu0 %918
  %v921 = vmul.f32 %v914, %v919
  %923 = vrot.lane.b32.xlu0 %v921, 32
  %v924 = vpop.permute.xlu0 %923
  %v926 = vadd.f32 %v916, %v924
  %v927 = vtanh.pop %v926
  %929 = vrot.lane.b32.xlu0 %v927, 32
  %v930 = vpop.permute.xlu0 %929
  %v932 = vmul.f32 %v914, %v930
  %v933 = vpack.c.bf16 %v932, %v932
  %935 = vrot.lane.b32.xlu0 %v933, 64
  %v936 = vpop.permute.xlu0 %935
  %v938 = vsel %vm150, %v936, 0
  %940 = vmatprep.subr.bf16.mxu0 0
  %941 = vmatpush1.bf16.msra.mxu0 0
  %942 = vmatprep.subr.bf16.mxu0 0
  %943 = vmatpush1.bf16.msra.mxu0 0
  %944 = vmatprep.subr.bf16.mxu0 0
  %945 = vmatpush1.bf16.msra.mxu0 0
  %946 = vmatprep.subr.bf16.mxu0 0
  %947 = vmatpush1.bf16.msra.mxu0 0
  %948 = vmatprep.subr.bf16.mxu0 0
  %949 = vmatpush1.bf16.msra.mxu0 0
  %950 = vmatprep.subr.bf16.mxu0 0
  %951 = vmatpush1.bf16.msra.mxu0 0
  %952 = vmatprep.subr.bf16.mxu0 0
  %953 = vmatpush1.bf16.msra.mxu0 %v865
  %954 = vmatprep.subr.bf16.mxu0 0
  %955 = vmatpush1.bf16.msra.mxu0 %v864
  %956 = vmatprep.subr.bf16.mxu0 0
  %957 = vmatpush2.bf16.msra.mxu0 0
  %958 = vmatprep.subr.bf16.mxu0 0
  %959 = vmatpush2.bf16.msra.mxu0 0
  %960 = vmatprep.subr.bf16.mxu0 0
  %961 = vmatpush2.bf16.msra.mxu0 0
  %962 = vmatprep.subr.bf16.mxu0 0
  %963 = vmatpush2.bf16.msra.mxu0 0
  %964 = vmatprep.subr.bf16.mxu0 0
  %965 = vmatpush2.bf16.msra.mxu0 0
  %966 = vmatprep.subr.bf16.mxu0 0
  %967 = vmatpush2.bf16.msra.mxu0 0
  %968 = vmatprep.subr.bf16.mxu0 0
  %969 = vmatpush2.bf16.msra.mxu0 0
  %970 = vmatprep.subr.bf16.mxu0 0
  %971 = vmatpush2.bf16.msra.mxu0 0
  %972 = vmatprep.mubr.bf16.mxu0 0
  %973 = vmatmul.mubr.bf16.gmra.mxu0 %v938
  %v974 = vpop.f32.mrf.mxu0
  %v975 = vadd.f32 0.0, %v974
  %v976 = vpop.f32.mrf.mxu0
  %v977 = vpop.f32.mrf.mxu0
  %v978 = vpop.f32.mrf.mxu0
  %979 = vdwg.mxu0
  %v980 = vadd.f32 %v829, %v975
  %v981 = vxor.u32 %v980, 2147483648
  %v982 = vmul.f32 %v981, 1.442695
  %v983 = vpow.pop %v982
  %v984 = vadd.f32 %v983, 1.0
  %v985 = vrcp.pop %v984
  %v986 = vmul.f32 1.0, %v985
  %v987 = vtanh.pop %v980
  %v988 = vmul.f32 %v986, %v926
  %990 = vrot.lane.b32.xlu0 %v987, 32
  %v991 = vpop.permute.xlu0 %990
  %v993 = vmul.f32 %v986, %v991
  %995 = vrot.lane.b32.xlu0 %v993, 32
  %v996 = vpop.permute.xlu0 %995
  %v998 = vadd.f32 %v988, %v996
  %v999 = vtanh.pop %v998
  %1001 = vrot.lane.b32.xlu0 %v999, 32
  %v1002 = vpop.permute.xlu0 %1001
  %v1004 = vmul.f32 %v986, %v1002
  %v1005 = vpack.c.bf16 %v1004, %v1004
  %1007 = vrot.lane.b32.xlu0 %v1005, 64
  %v1008 = vpop.permute.xlu0 %1007
  %v1010 = vsel %vm150, %v1008, 0
  %1012 = vmatprep.subr.bf16.mxu0 0
  %1013 = vmatpush1.bf16.msra.mxu0 0
  %1014 = vmatprep.subr.bf16.mxu0 0
  %1015 = vmatpush1.bf16.msra.mxu0 0
  %1016 = vmatprep.subr.bf16.mxu0 0
  %1017 = vmatpush1.bf16.msra.mxu0 0
  %1018 = vmatprep.subr.bf16.mxu0 0
  %1019 = vmatpush1.bf16.msra.mxu0 0
  %1020 = vmatprep.subr.bf16.mxu0 0
  %1021 = vmatpush1.bf16.msra.mxu0 0
  %1022 = vmatprep.subr.bf16.mxu0 0
  %1023 = vmatpush1.bf16.msra.mxu0 0
  %1024 = vmatprep.subr.bf16.mxu0 0
  %1025 = vmatpush1.bf16.msra.mxu0 %v865
  %1026 = vmatprep.subr.bf16.mxu0 0
  %1027 = vmatpush1.bf16.msra.mxu0 %v864
  %1028 = vmatprep.subr.bf16.mxu0 0
  %1029 = vmatpush2.bf16.msra.mxu0 0
  %1030 = vmatprep.subr.bf16.mxu0 0
  %1031 = vmatpush2.bf16.msra.mxu0 0
  %1032 = vmatprep.subr.bf16.mxu0 0
  %1033 = vmatpush2.bf16.msra.mxu0 0
  %1034 = vmatprep.subr.bf16.mxu0 0
  %1035 = vmatpush2.bf16.msra.mxu0 0
  %1036 = vmatprep.subr.bf16.mxu0 0
  %1037 = vmatpush2.bf16.msra.mxu0 0
  %1038 = vmatprep.subr.bf16.mxu0 0
  %1039 = vmatpush2.bf16.msra.mxu0 0
  %1040 = vmatprep.subr.bf16.mxu0 0
  %1041 = vmatpush2.bf16.msra.mxu0 0
  %1042 = vmatprep.subr.bf16.mxu0 0
  %1043 = vmatpush2.bf16.msra.mxu0 0
  %1044 = vmatprep.mubr.bf16.mxu0 0
  %1045 = vmatmul.mubr.bf16.gmra.mxu0 %v1010
  %v1046 = vpop.f32.mrf.mxu0
  %v1047 = vadd.f32 0.0, %v1046
  %v1048 = vpop.f32.mrf.mxu0
  %v1049 = vpop.f32.mrf.mxu0
  %v1050 = vpop.f32.mrf.mxu0
  %1051 = vdwg.mxu0
  %v1052 = vadd.f32 %v834, %v1047
  %v1053 = vxor.u32 %v1052, 2147483648
  %v1054 = vmul.f32 %v1053, 1.442695
  %v1055 = vpow.pop %v1054
  %v1056 = vadd.f32 %v1055, 1.0
  %v1057 = vrcp.pop %v1056
  %v1058 = vmul.f32 1.0, %v1057
  %v1059 = vtanh.pop %v1052
  %v1060 = vmul.f32 %v1058, %v998
  %1062 = vrot.lane.b32.xlu0 %v1059, 32
  %v1063 = vpop.permute.xlu0 %1062
  %v1065 = vmul.f32 %v1058, %v1063
  %1067 = vrot.lane.b32.xlu0 %v1065, 32
  %v1068 = vpop.permute.xlu0 %1067
  %v1070 = vadd.f32 %v1060, %v1068
  %v1071 = vtanh.pop %v1070
  %1073 = vrot.lane.b32.xlu0 %v1071, 32
  %v1074 = vpop.permute.xlu0 %1073
  %v1076 = vmul.f32 %v1058, %v1074
  %v1077 = vpack.c.bf16 %v1076, %v1076
  %1079 = vrot.lane.b32.xlu0 %v1077, 64
  %v1080 = vpop.permute.xlu0 %1079
  %v1082 = vsel %vm150, %v1080, 0
  %1084 = vmatprep.subr.bf16.mxu0 0
  %1085 = vmatpush1.bf16.msra.mxu0 0
  %1086 = vmatprep.subr.bf16.mxu0 0
  %1087 = vmatpush1.bf16.msra.mxu0 0
  %1088 = vmatprep.subr.bf16.mxu0 0
  %1089 = vmatpush1.bf16.msra.mxu0 0
  %1090 = vmatprep.subr.bf16.mxu0 0
  %1091 = vmatpush1.bf16.msra.mxu0 0
  %1092 = vmatprep.subr.bf16.mxu0 0
  %1093 = vmatpush1.bf16.msra.mxu0 0
  %1094 = vmatprep.subr.bf16.mxu0 0
  %1095 = vmatpush1.bf16.msra.mxu0 0
  %1096 = vmatprep.subr.bf16.mxu0 0
  %1097 = vmatpush1.bf16.msra.mxu0 %v865
  %1098 = vmatprep.subr.bf16.mxu0 0
  %1099 = vmatpush1.bf16.msra.mxu0 %v864
  %1100 = vmatprep.subr.bf16.mxu0 0
  %1101 = vmatpush2.bf16.msra.mxu0 0
  %1102 = vmatprep.subr.bf16.mxu0 0
  %1103 = vmatpush2.bf16.msra.mxu0 0
  %1104 = vmatprep.subr.bf16.mxu0 0
  %1105 = vmatpush2.bf16.msra.mxu0 0
  %1106 = vmatprep.subr.bf16.mxu0 0
  %1107 = vmatpush2.bf16.msra.mxu0 0
  %1108 = vmatprep.subr.bf16.mxu0 0
  %1109 = vmatpush2.bf16.msra.mxu0 0
  %1110 = vmatprep.subr.bf16.mxu0 0
  %1111 = vmatpush2.bf16.msra.mxu0 0
  %1112 = vmatprep.subr.bf16.mxu0 0
  %1113 = vmatpush2.bf16.msra.mxu0 0
  %1114 = vmatprep.subr.bf16.mxu0 0
  %1115 = vmatpush2.bf16.msra.mxu0 0
  %1116 = vmatprep.mubr.bf16.mxu0 0
  %1117 = vmatmul.mubr.bf16.gmra.mxu0 %v1082
  %v1118 = vpop.f32.mrf.mxu0
  %v1119 = vadd.f32 0.0, %v1118
  %v1120 = vpop.f32.mrf.mxu0
  %v1121 = vpop.f32.mrf.mxu0
  %v1122 = vpop.f32.mrf.mxu0
  %1123 = vdwg.mxu0
  %v1124 = vadd.f32 %v837, %v1119
  %v1125 = vxor.u32 %v1124, 2147483648
  %v1126 = vmul.f32 %v1125, 1.442695
  %v1127 = vpow.pop %v1126
  %v1128 = vadd.f32 %v1127, 1.0
  %v1129 = vrcp.pop %v1128
  %v1130 = vmul.f32 1.0, %v1129
  %v1131 = vtanh.pop %v1124
  %v1132 = vmul.f32 %v1130, %v1070
  %1134 = vrot.lane.b32.xlu0 %v1131, 32
  %v1135 = vpop.permute.xlu0 %1134
  %v1137 = vmul.f32 %v1130, %v1135
  %1139 = vrot.lane.b32.xlu0 %v1137, 32
  %v1140 = vpop.permute.xlu0 %1139
  %v1142 = vadd.f32 %v1132, %v1140
  %v1143 = vtanh.pop %v1142
  %1145 = vrot.lane.b32.xlu0 %v1143, 32
  %v1146 = vpop.permute.xlu0 %1145
  %v1148 = vmul.f32 %v1130, %v1146
  %v1149 = vpack.c.bf16 %v1148, %v1148
  %1151 = vrot.lane.b32.xlu0 %v1149, 64
  %v1152 = vpop.permute.xlu0 %1151
  %v1154 = vsel %vm150, %v1152, 0
  %1156 = vmatprep.subr.bf16.mxu0 0
  %1157 = vmatpush1.bf16.msra.mxu0 0
  %1158 = vmatprep.subr.bf16.mxu0 0
  %1159 = vmatpush1.bf16.msra.mxu0 0
  %1160 = vmatprep.subr.bf16.mxu0 0
  %1161 = vmatpush1.bf16.msra.mxu0 0
  %1162 = vmatprep.subr.bf16.mxu0 0
  %1163 = vmatpush1.bf16.msra.mxu0 0
  %1164 = vmatprep.subr.bf16.mxu0 0
  %1165 = vmatpush1.bf16.msra.mxu0 0
  %1166 = vmatprep.subr.bf16.mxu0 0
  %1167 = vmatpush1.bf16.msra.mxu0 0
  %1168 = vmatprep.subr.bf16.mxu0 0
  %1169 = vmatpush1.bf16.msra.mxu0 %v865
  %1170 = vmatprep.subr.bf16.mxu0 0
  %1171 = vmatpush1.bf16.msra.mxu0 %v864
  %1172 = vmatprep.subr.bf16.mxu0 0
  %1173 = vmatpush2.bf16.msra.mxu0 0
  %1174 = vmatprep.subr.bf16.mxu0 0
  %1175 = vmatpush2.bf16.msra.mxu0 0
  %1176 = vmatprep.subr.bf16.mxu0 0
  %1177 = vmatpush2.bf16.msra.mxu0 0
  %1178 = vmatprep.subr.bf16.mxu0 0
  %1179 = vmatpush2.bf16.msra.mxu0 0
  %1180 = vmatprep.subr.bf16.mxu0 0
  %1181 = vmatpush2.bf16.msra.mxu0 0
  %1182 = vmatprep.subr.bf16.mxu0 0
  %1183 = vmatpush2.bf16.msra.mxu0 0
  %1184 = vmatprep.subr.bf16.mxu0 0
  %1185 = vmatpush2.bf16.msra.mxu0 0
  %1186 = vmatprep.subr.bf16.mxu0 0
  %1187 = vmatpush2.bf16.msra.mxu0 0
  %1188 = vmatprep.mubr.bf16.mxu0 0
  %1189 = vmatmul.mubr.bf16.gmra.mxu0 %v1154
  %v1190 = vpop.f32.mrf.mxu0
  %v1191 = vadd.f32 0.0, %v1190
  %v1192 = vpop.f32.mrf.mxu0
  %v1193 = vpop.f32.mrf.mxu0
  %v1194 = vpop.f32.mrf.mxu0
  %1195 = vdwg.mxu0
  %v1196 = vadd.f32 %v842, %v1191
  %v1197 = vxor.u32 %v1196, 2147483648
  %v1198 = vmul.f32 %v1197, 1.442695
  %v1199 = vpow.pop %v1198
  %v1200 = vadd.f32 %v1199, 1.0
  %v1201 = vrcp.pop %v1200
  %v1202 = vmul.f32 1.0, %v1201
  %v1203 = vtanh.pop %v1196
  %v1204 = vmul.f32 %v1202, %v1142
  %1206 = vrot.lane.b32.xlu0 %v1203, 32
  %v1207 = vpop.permute.xlu0 %1206
  %v1209 = vmul.f32 %v1202, %v1207
  %1211 = vrot.lane.b32.xlu0 %v1209, 32
  %v1212 = vpop.permute.xlu0 %1211
  %v1214 = vadd.f32 %v1204, %v1212
  %v1215 = vtanh.pop %v1214
  %1217 = vrot.lane.b32.xlu0 %v1215, 32
  %v1218 = vpop.permute.xlu0 %1217
  %v1220 = vmul.f32 %v1202, %v1218
  %v1221 = vpack.c.bf16 %v1220, %v1220
  %1223 = vrot.lane.b32.xlu0 %v1221, 64
  %v1224 = vpop.permute.xlu0 %1223
  %v1226 = vsel %vm150, %v1224, 0
  %1228 = vmatprep.subr.bf16.mxu0 0
  %1229 = vmatpush1.bf16.msra.mxu0 0
  %1230 = vmatprep.subr.bf16.mxu0 0
  %1231 = vmatpush1.bf16.msra.mxu0 0
  %1232 = vmatprep.subr.bf16.mxu0 0
  %1233 = vmatpush1.bf16.msra.mxu0 0
  %1234 = vmatprep.subr.bf16.mxu0 0
  %1235 = vmatpush1.bf16.msra.mxu0 0
  %1236 = vmatprep.subr.bf16.mxu0 0
  %1237 = vmatpush1.bf16.msra.mxu0 0
  %1238 = vmatprep.subr.bf16.mxu0 0
  %1239 = vmatpush1.bf16.msra.mxu0 0
  %1240 = vmatprep.subr.bf16.mxu0 0
  %1241 = vmatpush1.bf16.msra.mxu0 %v865
  %1242 = vmatprep.subr.bf16.mxu0 0
  %1243 = vmatpush1.bf16.msra.mxu0 %v864
  %1244 = vmatprep.subr.bf16.mxu0 0
  %1245 = vmatpush2.bf16.msra.mxu0 0
  %1246 = vmatprep.subr.bf16.mxu0 0
  %1247 = vmatpush2.bf16.msra.mxu0 0
  %1248 = vmatprep.subr.bf16.mxu0 0
  %1249 = vmatpush2.bf16.msra.mxu0 0
  %1250 = vmatprep.subr.bf16.mxu0 0
  %1251 = vmatpush2.bf16.msra.mxu0 0
  %1252 = vmatprep.subr.bf16.mxu0 0
  %1253 = vmatpush2.bf16.msra.mxu0 0
  %1254 = vmatprep.subr.bf16.mxu0 0
  %1255 = vmatpush2.bf16.msra.mxu0 0
  %1256 = vmatprep.subr.bf16.mxu0 0
  %1257 = vmatpush2.bf16.msra.mxu0 0
  %1258 = vmatprep.subr.bf16.mxu0 0
  %1259 = vmatpush2.bf16.msra.mxu0 0
  %1260 = vmatprep.mubr.bf16.mxu0 0
  %1261 = vmatmul.mubr.bf16.gmra.mxu0 %v1226
  %v1262 = vpop.f32.mrf.mxu0
  %v1263 = vadd.f32 0.0, %v1262
  %v1264 = vpop.f32.mrf.mxu0
  %v1265 = vpop.f32.mrf.mxu0
  %v1266 = vpop.f32.mrf.mxu0
  %1267 = vdwg.mxu0
  %v1268 = vadd.f32 %v845, %v1263
  %v1269 = vxor.u32 %v1268, 2147483648
  %v1270 = vmul.f32 %v1269, 1.442695
  %v1271 = vpow.pop %v1270
  %v1272 = vadd.f32 %v1271, 1.0
  %v1273 = vrcp.pop %v1272
  %v1274 = vmul.f32 1.0, %v1273
  %v1275 = vtanh.pop %v1268
  %v1276 = vmul.f32 %v1274, %v1214
  %1278 = vrot.lane.b32.xlu0 %v1275, 32
  %v1279 = vpop.permute.xlu0 %1278
  %v1281 = vmul.f32 %v1274, %v1279
  %1283 = vrot.lane.b32.xlu0 %v1281, 32
  %v1284 = vpop.permute.xlu0 %1283
  %v1286 = vadd.f32 %v1276, %v1284
  %v1287 = vtanh.pop %v1286
  %1289 = vrot.lane.b32.xlu0 %v1287, 32
  %v1290 = vpop.permute.xlu0 %1289
  %v1292 = vmul.f32 %v1274, %v1290
  %v1293 = vpack.c.bf16 %v1292, %v1292
  %1295 = vrot.lane.b32.xlu0 %v1293, 64
  %v1296 = vpop.permute.xlu0 %1295
  %v1298 = vsel %vm150, %v1296, 0
  %1300 = vmatprep.subr.bf16.mxu0 0
  %1301 = vmatpush1.bf16.msra.mxu0 0
  %1302 = vmatprep.subr.bf16.mxu0 0
  %1303 = vmatpush1.bf16.msra.mxu0 0
  %1304 = vmatprep.subr.bf16.mxu0 0
  %1305 = vmatpush1.bf16.msra.mxu0 0
  %1306 = vmatprep.subr.bf16.mxu0 0
  %1307 = vmatpush1.bf16.msra.mxu0 0
  %1308 = vmatprep.subr.bf16.mxu0 0
  %1309 = vmatpush1.bf16.msra.mxu0 0
  %1310 = vmatprep.subr.bf16.mxu0 0
  %1311 = vmatpush1.bf16.msra.mxu0 0
  %1312 = vmatprep.subr.bf16.mxu0 0
  %1313 = vmatpush1.bf16.msra.mxu0 %v865
  %1314 = vmatprep.subr.bf16.mxu0 0
  %1315 = vmatpush1.bf16.msra.mxu0 %v864
  %1316 = vmatprep.subr.bf16.mxu0 0
  %1317 = vmatpush2.bf16.msra.mxu0 0
  %1318 = vmatprep.subr.bf16.mxu0 0
  %1319 = vmatpush2.bf16.msra.mxu0 0
  %1320 = vmatprep.subr.bf16.mxu0 0
  %1321 = vmatpush2.bf16.msra.mxu0 0
  %1322 = vmatprep.subr.bf16.mxu0 0
  %1323 = vmatpush2.bf16.msra.mxu0 0
  %1324 = vmatprep.subr.bf16.mxu0 0
  %1325 = vmatpush2.bf16.msra.mxu0 0
  %1326 = vmatprep.subr.bf16.mxu0 0
  %1327 = vmatpush2.bf16.msra.mxu0 0
  %1328 = vmatprep.subr.bf16.mxu0 0
  %1329 = vmatpush2.bf16.msra.mxu0 0
  %1330 = vmatprep.subr.bf16.mxu0 0
  %1331 = vmatpush2.bf16.msra.mxu0 0
  %1332 = vmatprep.mubr.bf16.mxu0 0
  %1333 = vmatmul.mubr.bf16.gmra.mxu0 %v1298
  %v1334 = vpop.f32.mrf.mxu0
  %v1335 = vadd.f32 0.0, %v1334
  %v1336 = vpop.f32.mrf.mxu0
  %v1337 = vpop.f32.mrf.mxu0
  %v1338 = vpop.f32.mrf.mxu0
  %1339 = vdwg.mxu0
  %v1340 = vadd.f32 %v850, %v1335
  %v1341 = vxor.u32 %v1340, 2147483648
  %v1342 = vmul.f32 %v1341, 1.442695
  %v1343 = vpow.pop %v1342
  %v1344 = vadd.f32 %v1343, 1.0
  %v1345 = vrcp.pop %v1344
  %v1346 = vmul.f32 1.0, %v1345
  %v1347 = vtanh.pop %v1340
  %v1348 = vmul.f32 %v1346, %v1286
  %1350 = vrot.lane.b32.xlu0 %v1347, 32
  %v1351 = vpop.permute.xlu0 %1350
  %v1353 = vmul.f32 %v1346, %v1351
  %1355 = vrot.lane.b32.xlu0 %v1353, 32
  %v1356 = vpop.permute.xlu0 %1355
  %v1358 = vadd.f32 %v1348, %v1356
  %v1359 = vtanh.pop %v1358
  %1361 = vrot.lane.b32.xlu0 %v1359, 32
  %v1362 = vpop.permute.xlu0 %1361
  %v1364 = vmul.f32 %v1346, %v1362
  %v1365 = vpack.c.bf16 %v1364, %v1364
  %1367 = vrot.lane.b32.xlu0 %v1365, 64
  %v1368 = vpop.permute.xlu0 %1367
  %v1370 = vsel %vm150, %v1368, 0
  %1372 = vmatprep.subr.bf16.mxu0 0
  %1373 = vmatpush1.bf16.msra.mxu0 0
  %1374 = vmatprep.subr.bf16.mxu0 0
  %1375 = vmatpush1.bf16.msra.mxu0 0
  %1376 = vmatprep.subr.bf16.mxu0 0
  %1377 = vmatpush1.bf16.msra.mxu0 0
  %1378 = vmatprep.subr.bf16.mxu0 0
  %1379 = vmatpush1.bf16.msra.mxu0 0
  %1380 = vmatprep.subr.bf16.mxu0 0
  %1381 = vmatpush1.bf16.msra.mxu0 0
  %1382 = vmatprep.subr.bf16.mxu0 0
  %1383 = vmatpush1.bf16.msra.mxu0 0
  %1384 = vmatprep.subr.bf16.mxu0 0
  %1385 = vmatpush1.bf16.msra.mxu0 %v865
  %1386 = vmatprep.subr.bf16.mxu0 0
  %1387 = vmatpush1.bf16.msra.mxu0 %v864
  %1388 = vmatprep.subr.bf16.mxu0 0
  %1389 = vmatpush2.bf16.msra.mxu0 0
  %1390 = vmatprep.subr.bf16.mxu0 0
  %1391 = vmatpush2.bf16.msra.mxu0 0
  %1392 = vmatprep.subr.bf16.mxu0 0
  %1393 = vmatpush2.bf16.msra.mxu0 0
  %1394 = vmatprep.subr.bf16.mxu0 0
  %1395 = vmatpush2.bf16.msra.mxu0 0
  %1396 = vmatprep.subr.bf16.mxu0 0
  %1397 = vmatpush2.bf16.msra.mxu0 0
  %1398 = vmatprep.subr.bf16.mxu0 0
  %1399 = vmatpush2.bf16.msra.mxu0 0
  %1400 = vmatprep.subr.bf16.mxu0 0
  %1401 = vmatpush2.bf16.msra.mxu0 0
  %1402 = vmatprep.subr.bf16.mxu0 0
  %1403 = vmatpush2.bf16.msra.mxu0 0
  %1404 = vmatprep.mubr.bf16.mxu0 0
  %1405 = vmatmul.mubr.bf16.gmra.mxu0 %v1370
  %v1406 = vpop.f32.mrf.mxu0
  %v1407 = vadd.f32 0.0, %v1406
  %v1408 = vpop.f32.mrf.mxu0
  %v1409 = vpop.f32.mrf.mxu0
  %v1410 = vpop.f32.mrf.mxu0
  %1411 = vdwg.mxu0
  %v1412 = vadd.f32 %v853, %v1407
  %v1413 = vxor.u32 %v1412, 2147483648
  %v1414 = vmul.f32 %v1413, 1.442695
  %v1415 = vpow.pop %v1414
  %v1416 = vadd.f32 %v1415, 1.0
  %v1417 = vrcp.pop %v1416
  %v1418 = vmul.f32 1.0, %v1417
  %v1419 = vtanh.pop %v1412
  %v1420 = vmul.f32 %v1418, %v1358
  %1422 = vrot.lane.b32.xlu0 %v1419, 32
  %v1423 = vpop.permute.xlu0 %1422
  %v1425 = vmul.f32 %v1418, %v1423
  %1427 = vrot.lane.b32.xlu0 %v1425, 32
  %v1428 = vpop.permute.xlu0 %1427
  %v1430 = vadd.f32 %v1420, %v1428
  %v1431 = vtanh.pop %v1430
  %1433 = vrot.lane.b32.xlu0 %v1431, 32
  %v1434 = vpop.permute.xlu0 %1433
  %v1436 = vmul.f32 %v1418, %v1434
  %v1437 = vld [vmem:[%s1 + $0x38] sm:$0xf]
  %v1438 = vld [vmem:[%s1 + $0x3c] sm:$0xf]
  %v1439 = vld [vmem:[%s1 + $0x40] sm:$0xf]
  %v1440 = vld [vmem:[%s1 + $0x44] sm:$0xf]
  %v1441 = vld [vmem:[%s1 + $0x48] sm:$0xf]
  %v1442 = vld [vmem:[%s1 + $0x4c] sm:$0xf]
  %v1443 = vld [vmem:[%s1 + $0x50] sm:$0xf]
  %v1444 = vld [vmem:[%s1 + $0x54] sm:$0xf]
  %v1445 = vld [vmem:[%s1 + $0x58] sm:$0xf]
  %v1446 = vld [vmem:[%s1 + $0x5c] sm:$0xf]
  %v1447 = vld [vmem:[%s1 + $0x60] sm:$0xf]
  %v1448 = vld [vmem:[%s1 + $0x64] sm:$0xf]
  %v1449 = vld [vmem:[%s1 + $0x68] sm:$0xf]
  %v1450 = vld [vmem:[%s1 + $0x6c] sm:$0xf]
  %v1451 = vld [vmem:[%s1 + $0x70] sm:$0xf]
  %v1452 = vld [vmem:[%s1 + $0x74] sm:$0xf]
  %v1453 = vld [vmem:[%s1 + $0x78] sm:$0xf]
  %v1454 = vld [vmem:[%s1 + $0x7c] sm:$0xf]
  %v1455 = vld [vmem:[%s1 + $0x80] sm:$0xf]
  %v1456 = vld [vmem:[%s1 + $0x84] sm:$0xf]
  %v1457 = vld [vmem:[%s2 + $0x2] sm:$0x1]
  %v1458 = vld [vmem:[%s2 + $0x3] sm:$0x1]
  %v1459 = vpack.c.bf16 %v1436, %v1436
  %v1460 = vlaneseq
  %v1461 = vshrl.u32 %v1460, 7
  %v1462 = vsub.s32 0, %v1461
  %v1463 = vrot.slane %v1457, %v1462
  %1465 = vrot.lane.b32.xlu0 %v1459, 64
  %v1466 = vpop.permute.xlu0 %1465
  %v1471 = vunpack.c.l.b16 %v1437
  %v1472 = vunpack.c.l.b16 %v1438
  %v1473 = vunpack.c.l.b16 %v1439
  %v1474 = vunpack.c.l.b16 %v1440
  %v1475 = vpack.c.b16 %v1472, %v1471
  %v1476 = vpack.c.b16 %v1474, %v1473
  %v1480 = vsel %vm150, %v1466, 0
  %1482 = vmatprep.subr.bf16.mxu0 0
  %1483 = vmatpush1.bf16.msra.mxu0 0
  %1484 = vmatprep.subr.bf16.mxu0 0
  %1485 = vmatpush1.bf16.msra.mxu0 0
  %1486 = vmatprep.subr.bf16.mxu0 0
  %1487 = vmatpush1.bf16.msra.mxu0 0
  %1488 = vmatprep.subr.bf16.mxu0 0
  %1489 = vmatpush1.bf16.msra.mxu0 0
  %1490 = vmatprep.subr.bf16.mxu0 0
  %1491 = vmatpush1.bf16.msra.mxu0 0
  %1492 = vmatprep.subr.bf16.mxu0 0
  %1493 = vmatpush1.bf16.msra.mxu0 0
  %1494 = vmatprep.subr.bf16.mxu0 0
  %1495 = vmatpush1.bf16.msra.mxu0 %v1476
  %1496 = vmatprep.subr.bf16.mxu0 0
  %1497 = vmatpush1.bf16.msra.mxu0 %v1475
  %1498 = vmatprep.subr.bf16.mxu0 0
  %1499 = vmatpush2.bf16.msra.mxu0 0
  %1500 = vmatprep.subr.bf16.mxu0 0
  %1501 = vmatpush2.bf16.msra.mxu0 0
  %1502 = vmatprep.subr.bf16.mxu0 0
  %1503 = vmatpush2.bf16.msra.mxu0 0
  %1504 = vmatprep.subr.bf16.mxu0 0
  %1505 = vmatpush2.bf16.msra.mxu0 0
  %1506 = vmatprep.subr.bf16.mxu0 0
  %1507 = vmatpush2.bf16.msra.mxu0 0
  %1508 = vmatprep.subr.bf16.mxu0 0
  %1509 = vmatpush2.bf16.msra.mxu0 0
  %1510 = vmatprep.subr.bf16.mxu0 0
  %1511 = vmatpush2.bf16.msra.mxu0 0
  %1512 = vmatprep.subr.bf16.mxu0 0
  %1513 = vmatpush2.bf16.msra.mxu0 0
  %1514 = vmatprep.mubr.bf16.mxu0 0
  %1515 = vmatmul.mubr.bf16.gmra.mxu0 %v1480
  %v1516 = vpop.f32.mrf.mxu0
  %v1517 = vadd.f32 %v1463, %v1516
  %v1518 = vpop.f32.mrf.mxu0
  %v1519 = vpop.f32.mrf.mxu0
  %v1520 = vpop.f32.mrf.mxu0
  %1521 = vdwg.mxu0
  %v1522 = vmax.f32 %v1517, 0.0
  %v1523 = vpack.c.bf16 %v1522, %v1522
  %v1524 = vlaneseq
  %v1525 = vshrl.u32 %v1524, 7
  %v1526 = vsub.s32 0, %v1525
  %v1527 = vrot.slane %v1458, %v1526
  %v1544 = vunpack.c.l.b16 %v1441
  %v1545 = vunpack.c.l.b16 %v1442
  %v1546 = vunpack.c.l.b16 %v1443
  %v1547 = vunpack.c.l.b16 %v1444
  %v1548 = vunpack.c.l.b16 %v1445
  %v1549 = vunpack.c.l.b16 %v1446
  %v1550 = vunpack.c.l.b16 %v1447
  %v1551 = vunpack.c.l.b16 %v1448
  %v1552 = vunpack.c.l.b16 %v1449
  %v1553 = vunpack.c.l.b16 %v1450
  %v1554 = vunpack.c.l.b16 %v1451
  %v1555 = vunpack.c.l.b16 %v1452
  %v1556 = vunpack.c.l.b16 %v1453
  %v1557 = vunpack.c.l.b16 %v1454
  %v1558 = vunpack.c.l.b16 %v1455
  %v1559 = vunpack.c.l.b16 %v1456
  %v1560 = vpack.c.b16 %v1545, %v1544
  %v1561 = vpack.c.b16 %v1547, %v1546
  %v1562 = vpack.c.b16 %v1549, %v1548
  %v1563 = vpack.c.b16 %v1551, %v1550
  %v1564 = vpack.c.b16 %v1553, %v1552
  %v1565 = vpack.c.b16 %v1555, %v1554
  %v1566 = vpack.c.b16 %v1557, %v1556
  %v1567 = vpack.c.b16 %v1559, %v1558
  %1576 = vmatprep.subr.bf16.mxu0 0
  %1577 = vmatpush1.bf16.msra.mxu0 %v1567
  %1578 = vmatprep.subr.bf16.mxu0 0
  %1579 = vmatpush1.bf16.msra.mxu0 %v1566
  %1580 = vmatprep.subr.bf16.mxu0 0
  %1581 = vmatpush1.bf16.msra.mxu0 %v1565
  %1582 = vmatprep.subr.bf16.mxu0 0
  %1583 = vmatpush1.bf16.msra.mxu0 %v1564
  %1584 = vmatprep.subr.bf16.mxu0 0
  %1585 = vmatpush1.bf16.msra.mxu0 %v1563
  %1586 = vmatprep.subr.bf16.mxu0 0
  %1587 = vmatpush1.bf16.msra.mxu0 %v1562
  %1588 = vmatprep.subr.bf16.mxu0 0
  %1589 = vmatpush1.bf16.msra.mxu0 %v1561
  %1590 = vmatprep.subr.bf16.mxu0 0
  %1591 = vmatpush1.bf16.msra.mxu0 %v1560
  %1592 = vmatprep.subr.bf16.mxu0 0
  %1593 = vmatpush2.bf16.msra.mxu0 0
  %1594 = vmatprep.subr.bf16.mxu0 0
  %1595 = vmatpush2.bf16.msra.mxu0 0
  %1596 = vmatprep.subr.bf16.mxu0 0
  %1597 = vmatpush2.bf16.msra.mxu0 0
  %1598 = vmatprep.subr.bf16.mxu0 0
  %1599 = vmatpush2.bf16.msra.mxu0 0
  %1600 = vmatprep.subr.bf16.mxu0 0
  %1601 = vmatpush2.bf16.msra.mxu0 0
  %1602 = vmatprep.subr.bf16.mxu0 0
  %1603 = vmatpush2.bf16.msra.mxu0 0
  %1604 = vmatprep.subr.bf16.mxu0 0
  %1605 = vmatpush2.bf16.msra.mxu0 0
  %1606 = vmatprep.subr.bf16.mxu0 0
  %1607 = vmatpush2.bf16.msra.mxu0 0
  %1608 = vmatprep.mubr.bf16.mxu0 0
  %1609 = vmatmul.mubr.bf16.gmra.mxu0 %v1523
  %v1610 = vpop.f32.mrf.mxu0
  %v1611 = vadd.f32 %v1527, %v1610
  %v1612 = vpop.f32.mrf.mxu0
  %v1613 = vpop.f32.mrf.mxu0
  %v1614 = vpop.f32.mrf.mxu0
  %1615 = vdwg.mxu0
  %1616 = vst [vmem:[%s3] sm:$0xff] %v1611
  // Predicated region
  $region14: #{lstm_forward.1} parent=0 // pred_check
    _
  $region15: #{lstm_forward.1} parent=0 // pred_check_branch
    %1618 = sbr.rel (0) target = $region17
  $region16: #{lstm_forward.1} parent=0 // pred_region
    _
  $region17: #{lstm_forward.1} parent=0 // pred_fallthru
    _
  // Predicated region
  $region18: #{lstm_forward.1} parent=0 // pred_check
    _
  $region19: #{lstm_forward.1} parent=0 // pred_check_branch
    %1620 = sbr.rel (0) target = $region21
  $region20: #{lstm_forward.1} parent=0 // pred_region
    _
  $region21: #{lstm_forward.1} parent=0 // pred_fallthru
    _

</llo_original>
